<compile_context>
chip_gen: v6e
topology: v6e:2x2x1
jax: 0.10.0
libtpu: 0.0.40
codegen_flags: <defaults>
</compile_context>

<pallas_src>
import functools
import math

import jax
import jax.numpy as jnp
from jax import lax
from jax.experimental import pallas as pl
from jax.experimental.pallas import tpu as pltpu


_LN_EPS = 1e-5                      # torch.nn.LayerNorm default
_VMEM_LIMIT = 64 * 1024 * 1024      # above the 32 MiB scoped default, v7x-safe


# ---------------------------------------------------------------------------
# helpers
# ---------------------------------------------------------------------------

def _round_up(x, m):
    return (x + m - 1) // m * m


def _row_tile(m, tm_default):
    # As large as requested, never larger than the (8-aligned) row count.
    return min(tm_default, _round_up(m, 8))


def _pick_chunk(n, target):
    """Largest 128-lane-aligned divisor of n that is <= target (else n itself)."""
    if n <= target:
        return n
    c = (target // 128) * 128
    while c >= 128:
        if n % c == 0:
            return c
        c -= 128
    # TODO(synk): no lane-aligned divisor; full-width chunk may be VMEM-heavy.
    return n


# ---------------------------------------------------------------------------
# kernel 1: tiled linear  y = x @ W + b   (fused QKV projection)
# ---------------------------------------------------------------------------

def _linear_kernel(x_ref, w_ref, b_ref, o_ref, *, compute_dtype):
    y = jnp.dot(x_ref[...].astype(compute_dtype), w_ref[...],
                preferred_element_type=jnp.float32)
    o_ref[...] = (y + b_ref[...]).astype(o_ref.dtype)


def _linear(x2d, w, b, *, tm, tn_target, compute_dtype):
    M_pad, K = x2d.shape
    N = w.shape[1]
    tn = _pick_chunk(N, tn_target)
    wc = w.astype(compute_dtype)
    return pl.pallas_call(
        functools.partial(_linear_kernel, compute_dtype=compute_dtype),
        out_shape=jax.ShapeDtypeStruct((M_pad, N), x2d.dtype),
        grid_spec=pltpu.PrefetchScalarGridSpec(
            num_scalar_prefetch=0,
            grid=(M_pad // tm, N // tn),
            in_specs=[
                pl.BlockSpec((tm, K), lambda i, j: (i, 0)),   # x rows
                pl.BlockSpec((K, tn), lambda i, j: (0, j)),   # W column chunk
                pl.BlockSpec((1, tn), lambda i, j: (0, j)),   # bias chunk
            ],
            out_specs=pl.BlockSpec((tm, tn), lambda i, j: (i, j)),
        ),
        compiler_params=pltpu.CompilerParams(
            dimension_semantics=("parallel", "parallel"),
            vmem_limit_bytes=_VMEM_LIMIT),
        cost_estimate=pl.CostEstimate(
            flops=2 * M_pad * K * N,
            transcendentals=0,
            bytes_accessed=(x2d.size + M_pad * N) * x2d.dtype.itemsize
                           + wc.size * wc.dtype.itemsize + N * 4),
    )(x2d, wc, b.reshape(1, N).astype(jnp.float32))


# ---------------------------------------------------------------------------
# kernel 2: per-batch causal attention, all heads per grid step
# ---------------------------------------------------------------------------

def _attention_kernel(q_ref, k_ref, v_ref, o_ref, *, scale, n_head,
                      compute_dtype, approx):
    # q_ref/k_ref/v_ref: (S, NH, dn), o_ref: (S, NH*dn)
    S, _, DN = q_ref.shape
    row = lax.broadcasted_iota(jnp.int32, (S, S), 0)
    col = lax.broadcasted_iota(jnp.int32, (S, S), 1)
    causal = col <= row

    # Fold 1/sqrt(dn) into q: O(S*dn) multiplies instead of O(S^2).
    q = (q_ref[...].astype(jnp.float32) * scale).astype(compute_dtype)
    k = k_ref[...].astype(compute_dtype)
    v = v_ref[...].astype(compute_dtype)

    for h in range(n_head):                       # static unroll over heads
        qh, kh, vh = q[:, h, :], k[:, h, :], v[:, h, :]
        s = lax.dot_general(qh, kh, (((1,), (1,)), ((), ())),
                            preferred_element_type=jnp.float32)      # (S, S) f32
        s = jnp.where(causal, s, -1e30)           # causal mask; scores stay f32
        m = jnp.max(s, axis=-1, keepdims=True)
        p = jnp.exp(s - m)
        l = jnp.sum(p, axis=-1, keepdims=True)
        ctx = jnp.dot(p.astype(compute_dtype), vh,
                      preferred_element_type=jnp.float32)            # (S, dn)
        ctx = ctx * pl.reciprocal(l, approx=approx)                  # EUP slot
        o_ref[:, h * DN:(h + 1) * DN] = ctx.astype(o_ref.dtype)


def _make_qkv_index_map(slot):
    def index_map(b):
        return (b, slot, 0, 0)
    return index_map


def _attention(qkv4, *, batch, seq, n_head, out_dtype, compute_dtype):
    # qkv4: (M_pad, 3, NH, dn) free view of the fused QKV projection output.
    _, _, NH, DN = qkv4.shape
    Hq = NH * DN
    scale = 1.0 / math.sqrt(DN)
    approx = jnp.dtype(compute_dtype) != jnp.dtype(jnp.float32)

    def qkv_spec(slot):
        # rows [b*seq, (b+1)*seq) of the flattened tokens, q/k/v slot, all heads
        return pl.BlockSpec((seq, None, NH, DN), _make_qkv_index_map(slot))

    return pl.pallas_call(
        functools.partial(_attention_kernel, scale=scale, n_head=n_head,
                          compute_dtype=compute_dtype, approx=approx),
        out_shape=jax.ShapeDtypeStruct((batch, seq, Hq), out_dtype),
        grid_spec=pltpu.PrefetchScalarGridSpec(
            num_scalar_prefetch=0,
            grid=(batch,),
            in_specs=[qkv_spec(0), qkv_spec(1), qkv_spec(2)],
            out_specs=pl.BlockSpec((None, seq, Hq), lambda b: (b, 0, 0)),
        ),
        compiler_params=pltpu.CompilerParams(
            dimension_semantics=("parallel",),
            vmem_limit_bytes=_VMEM_LIMIT),
        cost_estimate=pl.CostEstimate(
            flops=4 * batch * NH * seq * seq * DN,
            transcendentals=batch * NH * seq * seq,
            bytes_accessed=4 * batch * seq * Hq * jnp.dtype(out_dtype).itemsize),
    )(qkv4, qkv4, qkv4)


# ---------------------------------------------------------------------------
# kernel 3: output projection + residual + LayerNorm1 (fused epilogue)
# ---------------------------------------------------------------------------

def _linear_residual_ln_kernel(a_ref, w_ref, b_ref, res_ref, g_ref, bb_ref,
                               o_ref, *, compute_dtype):
    y = jnp.dot(a_ref[...].astype(compute_dtype), w_ref[...],
                preferred_element_type=jnp.float32)
    z = y + b_ref[...] + res_ref[...].astype(jnp.float32)
    mean = jnp.mean(z, axis=-1, keepdims=True)
    zc = z - mean
    var = jnp.mean(zc * zc, axis=-1, keepdims=True)
    inv = lax.rsqrt(var + _LN_EPS)
    o_ref[...] = (zc * inv * g_ref[...] + bb_ref[...]).astype(o_ref.dtype)


def _linear_residual_ln(a2d, w, b, res2d, gamma, beta, *, tm, compute_dtype):
    M_pad, K = a2d.shape
    D = w.shape[1]
    wc = w.astype(compute_dtype)
    return pl.pallas_call(
        functools.partial(_linear_residual_ln_kernel, compute_dtype=compute_dtype),
        out_shape=jax.ShapeDtypeStruct((M_pad, D), res2d.dtype),
        grid_spec=pltpu.PrefetchScalarGridSpec(
            num_scalar_prefetch=0,
            grid=(M_pad // tm,),
            in_specs=[
                pl.BlockSpec((tm, K), lambda i: (i, 0)),    # attention context rows
                pl.BlockSpec((K, D), lambda i: (0, 0)),     # W_o
                pl.BlockSpec((1, D), lambda i: (0, 0)),     # b_o
                pl.BlockSpec((tm, D), lambda i: (i, 0)),    # residual (x) rows
                pl.BlockSpec((1, D), lambda i: (0, 0)),     # LN1 gamma
                pl.BlockSpec((1, D), lambda i: (0, 0)),     # LN1 beta
            ],
            out_specs=pl.BlockSpec((tm, D), lambda i: (i, 0)),
        ),
        compiler_params=pltpu.CompilerParams(
            dimension_semantics=("parallel",),
            vmem_limit_bytes=_VMEM_LIMIT),
        cost_estimate=pl.CostEstimate(
            flops=2 * M_pad * K * D,
            transcendentals=0,
            bytes_accessed=(a2d.size + res2d.size + M_pad * D) * res2d.dtype.itemsize
                           + wc.size * wc.dtype.itemsize),
    )(a2d, wc, b.reshape(1, D).astype(jnp.float32), res2d,
      gamma.reshape(1, D).astype(jnp.float32),
      beta.reshape(1, D).astype(jnp.float32))


# ---------------------------------------------------------------------------
# kernel 4: hidden-chunked FFN + residual + LayerNorm2 (fused epilogue)
# ---------------------------------------------------------------------------

def _ffn_residual_ln_kernel(x_ref, w1_ref, b1_ref, w2_ref, b2_ref, g_ref, bb_ref,
                            o_ref, acc_ref, *, compute_dtype):
    h_idx = pl.program_id(1)

    @pl.when(h_idx == 0)
    def _():
        acc_ref[...] = jnp.zeros_like(acc_ref)

    h = jnp.dot(x_ref[...].astype(compute_dtype), w1_ref[...],
                preferred_element_type=jnp.float32)
    h = jnp.maximum(h + b1_ref[...], 0.0)                       # ReLU in f32
    acc_ref[...] += jnp.dot(h.astype(compute_dtype), w2_ref[...],
                            preferred_element_type=jnp.float32)

    @pl.when(h_idx == pl.num_programs(1) - 1)
    def _():
        # residual is the FFN input itself (ln1): fused +b2, +residual, LayerNorm2
        z = acc_ref[...] + b2_ref[...] + x_ref[...].astype(jnp.float32)
        mean = jnp.mean(z, axis=-1, keepdims=True)
        zc = z - mean
        var = jnp.mean(zc * zc, axis=-1, keepdims=True)
        inv = lax.rsqrt(var + _LN_EPS)
        o_ref[...] = (zc * inv * g_ref[...] + bb_ref[...]).astype(o_ref.dtype)


def _ffn_residual_ln(x2d, w1, b1, w2, b2, gamma, beta, *, tm, tk_h_target,
                     compute_dtype):
    M_pad, D = x2d.shape
    H = w1.shape[1]
    tk_h = _pick_chunk(H, tk_h_target)
    w1c = w1.astype(compute_dtype)
    w2c = w2.astype(compute_dtype)
    return pl.pallas_call(
        functools.partial(_ffn_residual_ln_kernel, compute_dtype=compute_dtype),
        out_shape=jax.ShapeDtypeStruct((M_pad, D), x2d.dtype),
        grid_spec=pltpu.PrefetchScalarGridSpec(
            num_scalar_prefetch=0,
            grid=(M_pad // tm, H // tk_h),
            in_specs=[
                pl.BlockSpec((tm, D), lambda i, h: (i, 0)),     # ln1 rows (+ residual)
                pl.BlockSpec((D, tk_h), lambda i, h: (0, h)),   # W1 hidden chunk
                pl.BlockSpec((1, tk_h), lambda i, h: (0, h)),   # b1 hidden chunk
                pl.BlockSpec((tk_h, D), lambda i, h: (h, 0)),   # W2 hidden chunk
                pl.BlockSpec((1, D), lambda i, h: (0, 0)),      # b2
                pl.BlockSpec((1, D), lambda i, h: (0, 0)),      # LN2 gamma
                pl.BlockSpec((1, D), lambda i, h: (0, 0)),      # LN2 beta
            ],
            out_specs=pl.BlockSpec((tm, D), lambda i, h: (i, 0)),
            scratch_shapes=[pltpu.VMEM((tm, D), jnp.float32)],
        ),
        compiler_params=pltpu.CompilerParams(
            dimension_semantics=("parallel", "arbitrary"),
            vmem_limit_bytes=_VMEM_LIMIT),
        cost_estimate=pl.CostEstimate(
            flops=4 * M_pad * D * H,
            transcendentals=0,
            bytes_accessed=2 * M_pad * D * x2d.dtype.itemsize
                           + (w1c.size + w2c.size) * w1c.dtype.itemsize
                           * max(1, M_pad // tm) + (H + 3 * D) * 4),
    )(x2d, w1c, b1.reshape(1, H).astype(jnp.float32),
      w2c, b2.reshape(1, D).astype(jnp.float32),
      gamma.reshape(1, D).astype(jnp.float32),
      beta.reshape(1, D).astype(jnp.float32))


# ---------------------------------------------------------------------------
# full transformer block
# ---------------------------------------------------------------------------

@functools.partial(jax.jit, static_argnames=("n_head", "num_neuron",
                                             "compute_dtype", "tm", "tk_h", "tn"))
def transformer_block(x, params, *, n_head, num_neuron,
                      compute_dtype=jnp.bfloat16, tm=512, tk_h=512, tn=1024):
    """x: (batch, seq, dim_model) -> (batch, seq, dim_model)."""
    B, S, D = x.shape
    NH, DN = n_head, num_neuron
    Hq = NH * DN
    M = B * S

    row_tile = _row_tile(M, tm)
    M_pad = _round_up(M, row_tile)

    x2d = x.reshape(M, D)
    if M_pad != M:
        x2d = jnp.pad(x2d, ((0, M_pad - M), (0, 0)))   # pad once, slice once at end

    # 1. fused QKV projection (q = k = v = x -> one matmul, weights pre-fused)
    qkv = _linear(x2d, params["w_qkv"], params["b_qkv"],
                  tm=row_tile, tn_target=tn, compute_dtype=compute_dtype)
    qkv4 = qkv.reshape(M_pad, 3, NH, DN)               # free view; no transposes

    # 2. per-batch causal attention, all heads per grid step, lane-dense output
    attn = _attention(qkv4, batch=B, seq=S, n_head=NH,
                      out_dtype=x.dtype, compute_dtype=compute_dtype)   # (B, S, Hq)
    attn2d = attn.reshape(M, Hq)
    if M_pad != M:
        attn2d = jnp.pad(attn2d, ((0, M_pad - M), (0, 0)))

    # 3. output projection + residual + LayerNorm1 (fused)
    ln1 = _linear_residual_ln(attn2d, params["w_o"], params["b_o"], x2d,
                              params["ln1_g"], params["ln1_b"],
                              tm=row_tile, compute_dtype=compute_dtype)

    # 4. position-wise FFN + residual + LayerNorm2 (fused)
    out2d = _ffn_residual_ln(ln1, params["w1"], params["b1"],
                             params["w2"], params["b2"],
                             params["ln2_g"], params["ln2_b"],
                             tm=row_tile, tk_h_target=tk_h,
                             compute_dtype=compute_dtype)

    if M_pad != M:
        out2d = out2d[:M]
    return out2d.reshape(B, S, D)


# ---------------------------------------------------------------------------
# parameter init (mimics nn.Linear / nn.LayerNorm defaults) + pure-JAX reference
# ---------------------------------------------------------------------------

def init_params(key, dim_model, num_neuron, n_head, dtype=jnp.float32):
    Hq = n_head * num_neuron
    H = 4 * dim_model
    keys = jax.random.split(key, 12)

    def linear_init(kw, kb, fan_in, fan_out):
        bound = 1.0 / math.sqrt(fan_in)
        w = jax.random.uniform(kw, (fan_in, fan_out), dtype, -bound, bound)
        b = jax.random.uniform(kb, (fan_out,), dtype, -bound, bound)
        return w, b

    w_q, b_q = linear_init(keys[0], keys[1], dim_model, Hq)
    w_k, b_k = linear_init(keys[2], keys[3], dim_model, Hq)
    w_v, b_v = linear_init(keys[4], keys[5], dim_model, Hq)
    w_o, b_o = linear_init(keys[6], keys[7], Hq, dim_model)
    w1, b1 = linear_init(keys[8], keys[9], dim_model, H)
    w2, b2 = linear_init(keys[10], keys[11], H, dim_model)

    return dict(
        # QKV weights fused once at init time (no per-forward HBM concat)
        w_qkv=jnp.concatenate([w_q, w_k, w_v], axis=1),
        b_qkv=jnp.concatenate([b_q, b_k, b_v], axis=0),
        w_o=w_o, b_o=b_o,
        ln1_g=jnp.ones((dim_model,), dtype), ln1_b=jnp.zeros((dim_model,), dtype),
        ln2_g=jnp.ones((dim_model,), dtype), ln2_b=jnp.zeros((dim_model,), dtype),
        w1=w1, b1=b1, w2=w2, b2=b2,
    )


def reference_block(x, params, *, n_head, num_neuron, eps=_LN_EPS):
    B, S, D = x.shape
    Hq = n_head * num_neuron
    w_qkv, b_qkv = params["w_qkv"], params["b_qkv"]
    w_q, w_k, w_v = w_qkv[:, :Hq], w_qkv[:, Hq:2 * Hq], w_qkv[:, 2 * Hq:]
    b_q, b_k, b_v = b_qkv[:Hq], b_qkv[Hq:2 * Hq], b_qkv[2 * Hq:]

    def layernorm(t, g, b):
        mean = jnp.mean(t, axis=-1, keepdims=True)
        var = jnp.mean((t - mean) ** 2, axis=-1, keepdims=True)
        return (t - mean) / jnp.sqrt(var + eps) * g + b

    def heads(t):
        return t.reshape(B, S, n_head, num_neuron).transpose(0, 2, 1, 3)

    q = heads(x @ w_q + b_q)
    k = heads(x @ w_k + b_k)
    v = heads(x @ w_v + b_v)

    scores = q @ jnp.swapaxes(k, -1, -2) / math.sqrt(num_neuron)
    mask = jnp.tril(jnp.ones((S, S), bool))
    scores = jnp.where(mask, scores, -jnp.inf)
    attn = jax.nn.softmax(scores, axis=-1)
    ctx = (attn @ v).transpose(0, 2, 1, 3).reshape(B, S, Hq)
    mha = ctx @ params["w_o"] + params["b_o"]

    ln1 = layernorm(x + mha, params["ln1_g"], params["ln1_b"])
    ff = jnp.maximum(ln1 @ params["w1"] + params["b1"], 0.0) @ params["w2"] + params["b2"]
    return layernorm(ln1 + ff, params["ln2_g"], params["ln2_b"])


if __name__ == "__main__":
    key = jax.random.PRNGKey(0)
    kx, kp = jax.random.split(key)

    batch, seq, dim_model = 2, 8, 32
    n_head, num_neuron = 4, 8          # n_head * num_neuron == dim_model here

    x = jax.random.normal(kx, (batch, seq, dim_model), jnp.float32)
    params = init_params(kp, dim_model, num_neuron, n_head)

    with jax.default_matmul_precision("highest"):
        ref = reference_block(x, params, n_head=n_head, num_neuron=num_neuron)
    ref = jax.block_until_ready(ref)

    # f32 MXU path: tight check against the pure-JAX reference.
    out_f32 = transformer_block(x, params, n_head=n_head, num_neuron=num_neuron,
                                compute_dtype=jnp.float32)
    out_f32 = jax.block_until_ready(out_f32)
    assert out_f32.shape == (batch, seq, dim_model)
    diff_f32 = float(jnp.max(jnp.abs(out_f32 - ref)))
    assert jnp.allclose(out_f32, ref, atol=2e-4, rtol=2e-3), (
        f"f32 mismatch vs reference: max |diff| = {diff_f32}")

    # bf16 MXU path (default, f32 accumulation / statistics): loose check.
    out_bf16 = transformer_block(x, params, n_head=n_head, num_neuron=num_neuron,
                                 compute_dtype=jnp.bfloat16)
    out_bf16 = jax.block_until_ready(out_bf16)
    diff_bf16 = float(jnp.max(jnp.abs(out_bf16 - ref)))
    assert jnp.allclose(out_bf16, ref, atol=1e-1, rtol=1e-1), (
        f"bf16 mismatch vs reference: max |diff| = {diff_bf16}")

    print("KERNEL_OK")
</pallas_src>

<mosaic_0001>
module attributes {stable_mosaic.version = 11 : i64} {
  func.func @_linear_kernel(%arg0: i32, %arg1: i32, %arg2: memref<16x32xf32, #tpu.memory_space<vmem>>, %arg3: memref<32x96xf32, #tpu.memory_space<vmem>>, %arg4: memref<1x96xf32, #tpu.memory_space<vmem>>, %arg5: memref<16x96xf32, #tpu.memory_space<vmem>>) attributes {dimension_semantics = [#tpu.dimension_semantics<parallel>, #tpu.dimension_semantics<parallel>], iteration_bounds = array<i64: 1, 1>, scalar_prefetch = 0 : i64, scratch_operands = 0 : i64, tpu.core_type = #tpu.core_type<tc>, window_params = [{transform_indices = @transform_0, window_bounds = array<i64: 16, 32>}, {transform_indices = @transform_1, window_bounds = array<i64: 32, 96>}, {transform_indices = @transform_2, window_bounds = array<i64: 1, 96>}, {transform_indices = @transform_3, window_bounds = array<i64: 16, 96>}]} {
    %c0 = arith.constant 0 : index
    %c0_0 = arith.constant 0 : index
    %0 = vector.load %arg2[%c0, %c0_0] : memref<16x32xf32, #tpu.memory_space<vmem>>, vector<16x32xf32>
    %c0_1 = arith.constant 0 : index
    %c0_2 = arith.constant 0 : index
    %1 = vector.load %arg3[%c0_1, %c0_2] : memref<32x96xf32, #tpu.memory_space<vmem>>, vector<32x96xf32>
    %cst = arith.constant dense<0.000000e+00> : vector<16x96xf32>
    %2 = tpu.matmul %0, %1, %cst {dimension_numbers = #tpu.dot_dimension_numbers<[1], [0], [0], [1], [0, 0, 1, 1], [], []>} : vector<16x32xf32>, vector<32x96xf32>, vector<16x96xf32> -> vector<16x96xf32>
    %c0_3 = arith.constant 0 : index
    %c0_4 = arith.constant 0 : index
    %3 = vector.load %arg4[%c0_3, %c0_4] : memref<1x96xf32, #tpu.memory_space<vmem>>, vector<1x96xf32>
    %4 = vector.broadcast %3 : vector<1x96xf32> to vector<16x96xf32>
    %5 = arith.addf %2, %4 : vector<16x96xf32>
    %c0_5 = arith.constant 0 : index
    %c0_6 = arith.constant 0 : index
    %6 = vector.load %arg5[%c0_5, %c0_6] : memref<16x96xf32, #tpu.memory_space<vmem>>, vector<16x96xf32>
    tpu.vector_store %arg5[%c0_5, %c0_6], %5 {strides = array<i32>} : memref<16x96xf32, #tpu.memory_space<vmem>>, vector<16x96xf32>,
    return
  }
  func.func @transform_0(%arg0: i32, %arg1: i32) -> (i32, i32) {
    %c0_i32 = arith.constant 0 : i32
    %c0_i32_0 = arith.constant 0 : i32
    return %arg0, %c0_i32 : i32, i32
  }
  func.func @transform_1(%arg0: i32, %arg1: i32) -> (i32, i32) {
    %c0_i32 = arith.constant 0 : i32
    %c0_i32_0 = arith.constant 0 : i32
    return %c0_i32, %arg1 : i32, i32
  }
  func.func @transform_2(%arg0: i32, %arg1: i32) -> (i32, i32) {
    %c0_i32 = arith.constant 0 : i32
    %c0_i32_0 = arith.constant 0 : i32
    return %c0_i32, %arg1 : i32, i32
  }
  func.func @transform_3(%arg0: i32, %arg1: i32) -> (i32, i32) {
    %c0_i32 = arith.constant 0 : i32
    return %arg0, %arg1 : i32, i32
  }
}

module attributes {stable_mosaic.version = 11 : i64} {
  func.func @_attention_kernel(%arg0: i32, %arg1: memref<8x1x4x8xf32, #tpu.memory_space<vmem>>, %arg2: memref<8x1x4x8xf32, #tpu.memory_space<vmem>>, %arg3: memref<8x1x4x8xf32, #tpu.memory_space<vmem>>, %arg4: memref<1x8x32xf32, #tpu.memory_space<vmem>>) attributes {dimension_semantics = [#tpu.dimension_semantics<parallel>], iteration_bounds = array<i64: 2>, scalar_prefetch = 0 : i64, scratch_operands = 0 : i64, tpu.core_type = #tpu.core_type<tc>, window_params = [{transform_indices = @transform_0, window_bounds = array<i64: 8, 1, 4, 8>}, {transform_indices = @transform_1, window_bounds = array<i64: 8, 1, 4, 8>}, {transform_indices = @transform_2, window_bounds = array<i64: 8, 1, 4, 8>}, {transform_indices = @transform_3, window_bounds = array<i64: 1, 8, 32>}]} {
    %0 = tpu.iota {dimensions = array<i32: 0>} : vector<8x8xi32>
    %1 = tpu.iota {dimensions = array<i32: 1>} : vector<8x8xi32>
    %2 = arith.cmpi sle, %1, %0 : vector<8x8xi32>
    %c0 = arith.constant 0 : index
    %c0_0 = arith.constant 0 : index
    %c0_1 = arith.constant 0 : index
    %c0_2 = arith.constant 0 : index
    %3 = vector.load %arg1[%c0, %c0_0, %c0_1, %c0_2] : memref<8x1x4x8xf32, #tpu.memory_space<vmem>>, vector<8x1x4x8xf32>
    %4 = vector.shape_cast %3 : vector<8x1x4x8xf32> to vector<8x4x8xf32>
    %cst = arith.constant 0.353553385 : f32
    %5 = vector.broadcast %cst : f32 to vector<8x4x8xf32>
    %6 = arith.mulf %4, %5 : vector<8x4x8xf32>
    %c0_3 = arith.constant 0 : index
    %c0_4 = arith.constant 0 : index
    %c0_5 = arith.constant 0 : index
    %c0_6 = arith.constant 0 : index
    %7 = vector.load %arg2[%c0_3, %c0_4, %c0_5, %c0_6] : memref<8x1x4x8xf32, #tpu.memory_space<vmem>>, vector<8x1x4x8xf32>
    %8 = vector.shape_cast %7 : vector<8x1x4x8xf32> to vector<8x4x8xf32>
    %c0_7 = arith.constant 0 : index
    %c0_8 = arith.constant 0 : index
    %c0_9 = arith.constant 0 : index
    %c0_10 = arith.constant 0 : index
    %9 = vector.load %arg3[%c0_7, %c0_8, %c0_9, %c0_10] : memref<8x1x4x8xf32, #tpu.memory_space<vmem>>, vector<8x1x4x8xf32>
    %10 = vector.shape_cast %9 : vector<8x1x4x8xf32> to vector<8x4x8xf32>
    %11 = vector.extract_strided_slice %6 {offsets = [0, 0, 0], sizes = [8, 1, 8], strides = [1, 1, 1]} : vector<8x4x8xf32> to vector<8x1x8xf32>
    %12 = vector.shape_cast %11 : vector<8x1x8xf32> to vector<8x8xf32>
    %13 = vector.extract_strided_slice %8 {offsets = [0, 0, 0], sizes = [8, 1, 8], strides = [1, 1, 1]} : vector<8x4x8xf32> to vector<8x1x8xf32>
    %14 = vector.shape_cast %13 : vector<8x1x8xf32> to vector<8x8xf32>
    %15 = vector.extract_strided_slice %10 {offsets = [0, 0, 0], sizes = [8, 1, 8], strides = [1, 1, 1]} : vector<8x4x8xf32> to vector<8x1x8xf32>
    %16 = vector.shape_cast %15 : vector<8x1x8xf32> to vector<8x8xf32>
    %cst_11 = arith.constant dense<0.000000e+00> : vector<8x8xf32>
    %17 = tpu.matmul %12, %14, %cst_11 {dimension_numbers = #tpu.dot_dimension_numbers<[1], [1], [0], [0], [0, 0, 1, 0], [], []>} : vector<8x8xf32>, vector<8x8xf32>, vector<8x8xf32> -> vector<8x8xf32>
    %cst_12 = arith.constant -1.000000e+30 : f32
    %18 = vector.broadcast %cst_12 : f32 to vector<8x8xf32>
    %19 = arith.select %2, %17, %18 : vector<8x8xi1>, vector<8x8xf32>
    %cst_13 = arith.constant dense<0xFF800000> : vector<8xf32>
    %20 = vector.multi_reduction <maximumf>, %19, %cst_13 [1] : vector<8x8xf32> to vector<8xf32>
    %21 = vector.shape_cast %20 : vector<8xf32> to vector<8x1xf32>
    %22 = vector.broadcast %21 : vector<8x1xf32> to vector<8x8xf32>
    %23 = arith.subf %19, %22 : vector<8x8xf32>
    %24 = math.exp %23 : vector<8x8xf32>
    %cst_14 = arith.constant dense<0.000000e+00> : vector<8xf32>
    %25 = vector.multi_reduction <add>, %24, %cst_14 [1] : vector<8x8xf32> to vector<8xf32>
    %26 = vector.shape_cast %25 : vector<8xf32> to vector<8x1xf32>
    %cst_15 = arith.constant dense<0.000000e+00> : vector<8x8xf32>
    %27 = tpu.matmul %24, %16, %cst_15 {dimension_numbers = #tpu.dot_dimension_numbers<[1], [0], [0], [1], [0, 0, 1, 1], [], []>} : vector<8x8xf32>, vector<8x8xf32>, vector<8x8xf32> -> vector<8x8xf32>
    %28 = tpu.reciprocal %26 : vector<8x1xf32> -> vector<8x1xf32>
    %29 = vector.broadcast %28 : vector<8x1xf32> to vector<8x8xf32>
    %30 = arith.mulf %27, %29 : vector<8x8xf32>
    %c0_16 = arith.constant 0 : index
    %c0_17 = arith.constant 0 : index
    %c0_18 = arith.constant 0 : index
    %31 = vector.load %arg4[%c0_16, %c0_17, %c0_18] : memref<1x8x32xf32, #tpu.memory_space<vmem>>, vector<1x8x8xf32>
    %32 = vector.shape_cast %31 : vector<1x8x8xf32> to vector<8x8xf32>
    %33 = vector.shape_cast %30 : vector<8x8xf32> to vector<1x8x8xf32>
    tpu.vector_store %arg4[%c0_16, %c0_17, %c0_18], %33 {strides = array<i32>} : memref<1x8x32xf32, #tpu.memory_space<vmem>>, vector<1x8x8xf32>,
    %34 = vector.extract_strided_slice %6 {offsets = [0, 1, 0], sizes = [8, 1, 8], strides = [1, 1, 1]} : vector<8x4x8xf32> to vector<8x1x8xf32>
    %35 = vector.shape_cast %34 : vector<8x1x8xf32> to vector<8x8xf32>
    %36 = vector.extract_strided_slice %8 {offsets = [0, 1, 0], sizes = [8, 1, 8], strides = [1, 1, 1]} : vector<8x4x8xf32> to vector<8x1x8xf32>
    %37 = vector.shape_cast %36 : vector<8x1x8xf32> to vector<8x8xf32>
    %38 = vector.extract_strided_slice %10 {offsets = [0, 1, 0], sizes = [8, 1, 8], strides = [1, 1, 1]} : vector<8x4x8xf32> to vector<8x1x8xf32>
    %39 = vector.shape_cast %38 : vector<8x1x8xf32> to vector<8x8xf32>
    %cst_19 = arith.constant dense<0.000000e+00> : vector<8x8xf32>
    %40 = tpu.matmul %35, %37, %cst_19 {dimension_numbers = #tpu.dot_dimension_numbers<[1], [1], [0], [0], [0, 0, 1, 0], [], []>} : vector<8x8xf32>, vector<8x8xf32>, vector<8x8xf32> -> vector<8x8xf32>
    %cst_20 = arith.constant -1.000000e+30 : f32
    %41 = vector.broadcast %cst_20 : f32 to vector<8x8xf32>
    %42 = arith.select %2, %40, %41 : vector<8x8xi1>, vector<8x8xf32>
    %cst_21 = arith.constant dense<0xFF800000> : vector<8xf32>
    %43 = vector.multi_reduction <maximumf>, %42, %cst_21 [1] : vector<8x8xf32> to vector<8xf32>
    %44 = vector.shape_cast %43 : vector<8xf32> to vector<8x1xf32>
    %45 = vector.broadcast %44 : vector<8x1xf32> to vector<8x8xf32>
    %46 = arith.subf %42, %45 : vector<8x8xf32>
    %47 = math.exp %46 : vector<8x8xf32>
    %cst_22 = arith.constant dense<0.000000e+00> : vector<8xf32>
    %48 = vector.multi_reduction <add>, %47, %cst_22 [1] : vector<8x8xf32> to vector<8xf32>
    %49 = vector.shape_cast %48 : vector<8xf32> to vector<8x1xf32>
    %cst_23 = arith.constant dense<0.000000e+00> : vector<8x8xf32>
    %50 = tpu.matmul %47, %39, %cst_23 {dimension_numbers = #tpu.dot_dimension_numbers<[1], [0], [0], [1], [0, 0, 1, 1], [], []>} : vector<8x8xf32>, vector<8x8xf32>, vector<8x8xf32> -> vector<8x8xf32>
    %51 = tpu.reciprocal %49 : vector<8x1xf32> -> vector<8x1xf32>
    %52 = vector.broadcast %51 : vector<8x1xf32> to vector<8x8xf32>
    %53 = arith.mulf %50, %52 : vector<8x8xf32>
    %c0_24 = arith.constant 0 : index
    %c0_25 = arith.constant 0 : index
    %c8 = arith.constant 8 : index
    %54 = vector.load %arg4[%c0_24, %c0_25, %c8] : memref<1x8x32xf32, #tpu.memory_space<vmem>>, vector<1x8x8xf32>
    %55 = vector.shape_cast %54 : vector<1x8x8xf32> to vector<8x8xf32>
    %56 = vector.shape_cast %53 : vector<8x8xf32> to vector<1x8x8xf32>
    tpu.vector_store %arg4[%c0_24, %c0_25, %c8], %56 {strides = array<i32>} : memref<1x8x32xf32, #tpu.memory_space<vmem>>, vector<1x8x8xf32>,
    %57 = vector.extract_strided_slice %6 {offsets = [0, 2, 0], sizes = [8, 1, 8], strides = [1, 1, 1]} : vector<8x4x8xf32> to vector<8x1x8xf32>
    %58 = vector.shape_cast %57 : vector<8x1x8xf32> to vector<8x8xf32>
    %59 = vector.extract_strided_slice %8 {offsets = [0, 2, 0], sizes = [8, 1, 8], strides = [1, 1, 1]} : vector<8x4x8xf32> to vector<8x1x8xf32>
    %60 = vector.shape_cast %59 : vector<8x1x8xf32> to vector<8x8xf32>
    %61 = vector.extract_strided_slice %10 {offsets = [0, 2, 0], sizes = [8, 1, 8], strides = [1, 1, 1]} : vector<8x4x8xf32> to vector<8x1x8xf32>
    %62 = vector.shape_cast %61 : vector<8x1x8xf32> to vector<8x8xf32>
    %cst_26 = arith.constant dense<0.000000e+00> : vector<8x8xf32>
    %63 = tpu.matmul %58, %60, %cst_26 {dimension_numbers = #tpu.dot_dimension_numbers<[1], [1], [0], [0], [0, 0, 1, 0], [], []>} : vector<8x8xf32>, vector<8x8xf32>, vector<8x8xf32> -> vector<8x8xf32>
    %cst_27 = arith.constant -1.000000e+30 : f32
    %64 = vector.broadcast %cst_27 : f32 to vector<8x8xf32>
    %65 = arith.select %2, %63, %64 : vector<8x8xi1>, vector<8x8xf32>
    %cst_28 = arith.constant dense<0xFF800000> : vector<8xf32>
    %66 = vector.multi_reduction <maximumf>, %65, %cst_28 [1] : vector<8x8xf32> to vector<8xf32>
    %67 = vector.shape_cast %66 : vector<8xf32> to vector<8x1xf32>
    %68 = vector.broadcast %67 : vector<8x1xf32> to vector<8x8xf32>
    %69 = arith.subf %65, %68 : vector<8x8xf32>
    %70 = math.exp %69 : vector<8x8xf32>
    %cst_29 = arith.constant dense<0.000000e+00> : vector<8xf32>
    %71 = vector.multi_reduction <add>, %70, %cst_29 [1] : vector<8x8xf32> to vector<8xf32>
    %72 = vector.shape_cast %71 : vector<8xf32> to vector<8x1xf32>
    %cst_30 = arith.constant dense<0.000000e+00> : vector<8x8xf32>
    %73 = tpu.matmul %70, %62, %cst_30 {dimension_numbers = #tpu.dot_dimension_numbers<[1], [0], [0], [1], [0, 0, 1, 1], [], []>} : vector<8x8xf32>, vector<8x8xf32>, vector<8x8xf32> -> vector<8x8xf32>
    %74 = tpu.reciprocal %72 : vector<8x1xf32> -> vector<8x1xf32>
    %75 = vector.broadcast %74 : vector<8x1xf32> to vector<8x8xf32>
    %76 = arith.mulf %73, %75 : vector<8x8xf32>
    %c0_31 = arith.constant 0 : index
    %c0_32 = arith.constant 0 : index
    %c16 = arith.constant 16 : index
    %77 = vector.load %arg4[%c0_31, %c0_32, %c16] : memref<1x8x32xf32, #tpu.memory_space<vmem>>, vector<1x8x8xf32>
    %78 = vector.shape_cast %77 : vector<1x8x8xf32> to vector<8x8xf32>
    %79 = vector.shape_cast %76 : vector<8x8xf32> to vector<1x8x8xf32>
    tpu.vector_store %arg4[%c0_31, %c0_32, %c16], %79 {strides = array<i32>} : memref<1x8x32xf32, #tpu.memory_space<vmem>>, vector<1x8x8xf32>,
    %80 = vector.extract_strided_slice %6 {offsets = [0, 3, 0], sizes = [8, 1, 8], strides = [1, 1, 1]} : vector<8x4x8xf32> to vector<8x1x8xf32>
    %81 = vector.shape_cast %80 : vector<8x1x8xf32> to vector<8x8xf32>
    %82 = vector.extract_strided_slice %8 {offsets = [0, 3, 0], sizes = [8, 1, 8], strides = [1, 1, 1]} : vector<8x4x8xf32> to vector<8x1x8xf32>
    %83 = vector.shape_cast %82 : vector<8x1x8xf32> to vector<8x8xf32>
    %84 = vector.extract_strided_slice %10 {offsets = [0, 3, 0], sizes = [8, 1, 8], strides = [1, 1, 1]} : vector<8x4x8xf32> to vector<8x1x8xf32>
    %85 = vector.shape_cast %84 : vector<8x1x8xf32> to vector<8x8xf32>
    %cst_33 = arith.constant dense<0.000000e+00> : vector<8x8xf32>
    %86 = tpu.matmul %81, %83, %cst_33 {dimension_numbers = #tpu.dot_dimension_numbers<[1], [1], [0], [0], [0, 0, 1, 0], [], []>} : vector<8x8xf32>, vector<8x8xf32>, vector<8x8xf32> -> vector<8x8xf32>
    %cst_34 = arith.constant -1.000000e+30 : f32
    %87 = vector.broadcast %cst_34 : f32 to vector<8x8xf32>
    %88 = arith.select %2, %86, %87 : vector<8x8xi1>, vector<8x8xf32>
    %cst_35 = arith.constant dense<0xFF800000> : vector<8xf32>
    %89 = vector.multi_reduction <maximumf>, %88, %cst_35 [1] : vector<8x8xf32> to vector<8xf32>
    %90 = vector.shape_cast %89 : vector<8xf32> to vector<8x1xf32>
    %91 = vector.broadcast %90 : vector<8x1xf32> to vector<8x8xf32>
    %92 = arith.subf %88, %91 : vector<8x8xf32>
    %93 = math.exp %92 : vector<8x8xf32>
    %cst_36 = arith.constant dense<0.000000e+00> : vector<8xf32>
    %94 = vector.multi_reduction <add>, %93, %cst_36 [1] : vector<8x8xf32> to vector<8xf32>
    %95 = vector.shape_cast %94 : vector<8xf32> to vector<8x1xf32>
    %cst_37 = arith.constant dense<0.000000e+00> : vector<8x8xf32>
    %96 = tpu.matmul %93, %85, %cst_37 {dimension_numbers = #tpu.dot_dimension_numbers<[1], [0], [0], [1], [0, 0, 1, 1], [], []>} : vector<8x8xf32>, vector<8x8xf32>, vector<8x8xf32> -> vector<8x8xf32>
    %97 = tpu.reciprocal %95 : vector<8x1xf32> -> vector<8x1xf32>
    %98 = vector.broadcast %97 : vector<8x1xf32> to vector<8x8xf32>
    %99 = arith.mulf %96, %98 : vector<8x8xf32>
    %c0_38 = arith.constant 0 : index
    %c0_39 = arith.constant 0 : index
    %c24 = arith.constant 24 : index
    %100 = vector.load %arg4[%c0_38, %c0_39, %c24] : memref<1x8x32xf32, #tpu.memory_space<vmem>>, vector<1x8x8xf32>
    %101 = vector.shape_cast %100 : vector<1x8x8xf32> to vector<8x8xf32>
    %102 = vector.shape_cast %99 : vector<8x8xf32> to vector<1x8x8xf32>
    tpu.vector_store %arg4[%c0_38, %c0_39, %c24], %102 {strides = array<i32>} : memref<1x8x32xf32, #tpu.memory_space<vmem>>, vector<1x8x8xf32>,
    return
  }
  func.func @transform_0(%arg0: i32) -> (i32, i32, i32, i32) {
    %c0_i32 = arith.constant 0 : i32
    %c0_i32_0 = arith.constant 0 : i32
    %c0_i32_1 = arith.constant 0 : i32
    %c0_i32_2 = arith.constant 0 : i32
    return %arg0, %c0_i32, %c0_i32_0, %c0_i32_1 : i32, i32, i32, i32
  }
  func.func @transform_1(%arg0: i32) -> (i32, i32, i32, i32) {
    %c1_i32 = arith.constant 1 : i32
    %c0_i32 = arith.constant 0 : i32
    %c0_i32_0 = arith.constant 0 : i32
    %c0_i32_1 = arith.constant 0 : i32
    return %arg0, %c1_i32, %c0_i32, %c0_i32_0 : i32, i32, i32, i32
  }
  func.func @transform_2(%arg0: i32) -> (i32, i32, i32, i32) {
    %c2_i32 = arith.constant 2 : i32
    %c0_i32 = arith.constant 0 : i32
    %c0_i32_0 = arith.constant 0 : i32
    %c0_i32_1 = arith.constant 0 : i32
    return %arg0, %c2_i32, %c0_i32, %c0_i32_0 : i32, i32, i32, i32
  }
  func.func @transform_3(%arg0: i32) -> (i32, i32, i32) {
    %c0_i32 = arith.constant 0 : i32
    %c0_i32_0 = arith.constant 0 : i32
    %c0_i32_1 = arith.constant 0 : i32
    return %arg0, %c0_i32, %c0_i32_0 : i32, i32, i32
  }
}

module attributes {stable_mosaic.version = 11 : i64} {
  func.func @_linear_residual_ln_kernel(%arg0: i32, %arg1: memref<16x32xf32, #tpu.memory_space<vmem>>, %arg2: memref<32x32xf32, #tpu.memory_space<vmem>>, %arg3: memref<1x32xf32, #tpu.memory_space<vmem>>, %arg4: memref<16x32xf32, #tpu.memory_space<vmem>>, %arg5: memref<1x32xf32, #tpu.memory_space<vmem>>, %arg6: memref<1x32xf32, #tpu.memory_space<vmem>>, %arg7: memref<16x32xf32, #tpu.memory_space<vmem>>) attributes {dimension_semantics = [#tpu.dimension_semantics<parallel>], iteration_bounds = array<i64: 1>, scalar_prefetch = 0 : i64, scratch_operands = 0 : i64, tpu.core_type = #tpu.core_type<tc>, window_params = [{transform_indices = @transform_0, window_bounds = array<i64: 16, 32>}, {pipeline_mode = #tpu.pipeline_mode<synchronous>, transform_indices = @transform_1, window_bounds = array<i64: 32, 32>}, {pipeline_mode = #tpu.pipeline_mode<synchronous>, transform_indices = @transform_2, window_bounds = array<i64: 1, 32>}, {transform_indices = @transform_3, window_bounds = array<i64: 16, 32>}, {pipeline_mode = #tpu.pipeline_mode<synchronous>, transform_indices = @transform_4, window_bounds = array<i64: 1, 32>}, {pipeline_mode = #tpu.pipeline_mode<synchronous>, transform_indices = @transform_5, window_bounds = array<i64: 1, 32>}, {transform_indices = @transform_6, window_bounds = array<i64: 16, 32>}]} {
    %c0 = arith.constant 0 : index
    %c0_0 = arith.constant 0 : index
    %0 = vector.load %arg1[%c0, %c0_0] : memref<16x32xf32, #tpu.memory_space<vmem>>, vector<16x32xf32>
    %c0_1 = arith.constant 0 : index
    %c0_2 = arith.constant 0 : index
    %1 = vector.load %arg2[%c0_1, %c0_2] : memref<32x32xf32, #tpu.memory_space<vmem>>, vector<32x32xf32>
    %cst = arith.constant dense<0.000000e+00> : vector<16x32xf32>
    %2 = tpu.matmul %0, %1, %cst {dimension_numbers = #tpu.dot_dimension_numbers<[1], [0], [0], [1], [0, 0, 1, 1], [], []>} : vector<16x32xf32>, vector<32x32xf32>, vector<16x32xf32> -> vector<16x32xf32>
    %c0_3 = arith.constant 0 : index
    %c0_4 = arith.constant 0 : index
    %3 = vector.load %arg3[%c0_3, %c0_4] : memref<1x32xf32, #tpu.memory_space<vmem>>, vector<1x32xf32>
    %4 = vector.broadcast %3 : vector<1x32xf32> to vector<16x32xf32>
    %5 = arith.addf %2, %4 : vector<16x32xf32>
    %c0_5 = arith.constant 0 : index
    %c0_6 = arith.constant 0 : index
    %6 = vector.load %arg4[%c0_5, %c0_6] : memref<16x32xf32, #tpu.memory_space<vmem>>, vector<16x32xf32>
    %7 = arith.addf %5, %6 : vector<16x32xf32>
    %cst_7 = arith.constant dense<0.000000e+00> : vector<16xf32>
    %8 = vector.multi_reduction <add>, %7, %cst_7 [1] : vector<16x32xf32> to vector<16xf32>
    %9 = vector.shape_cast %8 : vector<16xf32> to vector<16x1xf32>
    %cst_8 = arith.constant 3.200000e+01 : f32
    %10 = vector.broadcast %cst_8 : f32 to vector<16x1xf32>
    %11 = arith.divf %9, %10 : vector<16x1xf32>
    %12 = vector.broadcast %11 : vector<16x1xf32> to vector<16x32xf32>
    %13 = arith.subf %7, %12 : vector<16x32xf32>
    %14 = arith.mulf %13, %13 : vector<16x32xf32>
    %cst_9 = arith.constant dense<0.000000e+00> : vector<16xf32>
    %15 = vector.multi_reduction <add>, %14, %cst_9 [1] : vector<16x32xf32> to vector<16xf32>
    %16 = vector.shape_cast %15 : vector<16xf32> to vector<16x1xf32>
    %cst_10 = arith.constant 3.200000e+01 : f32
    %17 = vector.broadcast %cst_10 : f32 to vector<16x1xf32>
    %18 = arith.divf %16, %17 : vector<16x1xf32>
    %cst_11 = arith.constant 9.99999974E-6 : f32
    %19 = vector.broadcast %cst_11 : f32 to vector<16x1xf32>
    %20 = arith.addf %18, %19 : vector<16x1xf32>
    %21 = math.rsqrt %20 : vector<16x1xf32>
    %22 = vector.broadcast %21 : vector<16x1xf32> to vector<16x32xf32>
    %23 = arith.mulf %13, %22 : vector<16x32xf32>
    %c0_12 = arith.constant 0 : index
    %c0_13 = arith.constant 0 : index
    %24 = vector.load %arg5[%c0_12, %c0_13] : memref<1x32xf32, #tpu.memory_space<vmem>>, vector<1x32xf32>
    %25 = vector.broadcast %24 : vector<1x32xf32> to vector<16x32xf32>
    %26 = arith.mulf %23, %25 : vector<16x32xf32>
    %c0_14 = arith.constant 0 : index
    %c0_15 = arith.constant 0 : index
    %27 = vector.load %arg6[%c0_14, %c0_15] : memref<1x32xf32, #tpu.memory_space<vmem>>, vector<1x32xf32>
    %28 = vector.broadcast %27 : vector<1x32xf32> to vector<16x32xf32>
    %29 = arith.addf %26, %28 : vector<16x32xf32>
    %c0_16 = arith.constant 0 : index
    %c0_17 = arith.constant 0 : index
    %30 = vector.load %arg7[%c0_16, %c0_17] : memref<16x32xf32, #tpu.memory_space<vmem>>, vector<16x32xf32>
    tpu.vector_store %arg7[%c0_16, %c0_17], %29 {strides = array<i32>} : memref<16x32xf32, #tpu.memory_space<vmem>>, vector<16x32xf32>,
    return
  }
  func.func @transform_0(%arg0: i32) -> (i32, i32) {
    %c0_i32 = arith.constant 0 : i32
    %c0_i32_0 = arith.constant 0 : i32
    return %arg0, %c0_i32 : i32, i32
  }
  func.func @transform_1(%arg0: i32) -> (i32, i32) {
    %c0_i32 = arith.constant 0 : i32
    %c0_i32_0 = arith.constant 0 : i32
    %c0_i32_1 = arith.constant 0 : i32
    return %c0_i32, %c0_i32_0 : i32, i32
  }
  func.func @transform_2(%arg0: i32) -> (i32, i32) {
    %c0_i32 = arith.constant 0 : i32
    %c0_i32_0 = arith.constant 0 : i32
    %c0_i32_1 = arith.constant 0 : i32
    return %c0_i32, %c0_i32_0 : i32, i32
  }
  func.func @transform_3(%arg0: i32) -> (i32, i32) {
    %c0_i32 = arith.constant 0 : i32
    %c0_i32_0 = arith.constant 0 : i32
    return %arg0, %c0_i32 : i32, i32
  }
  func.func @transform_4(%arg0: i32) -> (i32, i32) {
    %c0_i32 = arith.constant 0 : i32
    %c0_i32_0 = arith.constant 0 : i32
    %c0_i32_1 = arith.constant 0 : i32
    return %c0_i32, %c0_i32_0 : i32, i32
  }
  func.func @transform_5(%arg0: i32) -> (i32, i32) {
    %c0_i32 = arith.constant 0 : i32
    %c0_i32_0 = arith.constant 0 : i32
    %c0_i32_1 = arith.constant 0 : i32
    return %c0_i32, %c0_i32_0 : i32, i32
  }
  func.func @transform_6(%arg0: i32) -> (i32, i32) {
    %c0_i32 = arith.constant 0 : i32
    %c0_i32_0 = arith.constant 0 : i32
    return %arg0, %c0_i32 : i32, i32
  }
}

module attributes {stable_mosaic.version = 11 : i64} {
  func.func @_ffn_residual_ln_kernel(%arg0: i32, %arg1: i32, %arg2: memref<16x32xf32, #tpu.memory_space<vmem>>, %arg3: memref<32x128xf32, #tpu.memory_space<vmem>>, %arg4: memref<1x128xf32, #tpu.memory_space<vmem>>, %arg5: memref<128x32xf32, #tpu.memory_space<vmem>>, %arg6: memref<1x32xf32, #tpu.memory_space<vmem>>, %arg7: memref<1x32xf32, #tpu.memory_space<vmem>>, %arg8: memref<1x32xf32, #tpu.memory_space<vmem>>, %arg9: memref<16x32xf32, #tpu.memory_space<vmem>>, %arg10: memref<16x32xf32, #tpu.memory_space<vmem>>) attributes {dimension_semantics = [#tpu.dimension_semantics<parallel>, #tpu.dimension_semantics<arbitrary>], iteration_bounds = array<i64: 1, 1>, scalar_prefetch = 0 : i64, scratch_operands = 1 : i64, tpu.core_type = #tpu.core_type<tc>, window_params = [{transform_indices = @transform_0, window_bounds = array<i64: 16, 32>}, {transform_indices = @transform_1, window_bounds = array<i64: 32, 128>}, {transform_indices = @transform_2, window_bounds = array<i64: 1, 128>}, {transform_indices = @transform_3, window_bounds = array<i64: 128, 32>}, {pipeline_mode = #tpu.pipeline_mode<synchronous>, transform_indices = @transform_4, window_bounds = array<i64: 1, 32>}, {pipeline_mode = #tpu.pipeline_mode<synchronous>, transform_indices = @transform_5, window_bounds = array<i64: 1, 32>}, {pipeline_mode = #tpu.pipeline_mode<synchronous>, transform_indices = @transform_6, window_bounds = array<i64: 1, 32>}, {transform_indices = @transform_7, window_bounds = array<i64: 16, 32>}]} {
    %c0_i32 = arith.constant 0 : i32
    %0 = arith.cmpi eq, %arg1, %c0_i32 : i32
    %1 = arith.extui %0 : i1 to i32
    %c0_i32_0 = arith.constant 0 : i32
    %2 = arith.cmpi ne, %1, %c0_i32_0 : i32
    scf.if %2 {
      %cst_16 = arith.constant 0.000000e+00 : f32
      %19 = vector.broadcast %cst_16 : f32 to vector<16x32xf32>
      %c0_17 = arith.constant 0 : index
      %c0_18 = arith.constant 0 : index
      %20 = vector.load %arg10[%c0_17, %c0_18] : memref<16x32xf32, #tpu.memory_space<vmem>>, vector<16x32xf32>
      tpu.vector_store %arg10[%c0_17, %c0_18], %19 {strides = array<i32>} : memref<16x32xf32, #tpu.memory_space<vmem>>, vector<16x32xf32>,
    } else {
    }
    %c0 = arith.constant 0 : index
    %c0_1 = arith.constant 0 : index
    %3 = vector.load %arg2[%c0, %c0_1] : memref<16x32xf32, #tpu.memory_space<vmem>>, vector<16x32xf32>
    %c0_2 = arith.constant 0 : index
    %c0_3 = arith.constant 0 : index
    %4 = vector.load %arg3[%c0_2, %c0_3] : memref<32x128xf32, #tpu.memory_space<vmem>>, vector<32x128xf32>
    %cst = arith.constant dense<0.000000e+00> : vector<16x128xf32>
    %5 = tpu.matmul %3, %4, %cst {dimension_numbers = #tpu.dot_dimension_numbers<[1], [0], [0], [1], [0, 0, 1, 1], [], []>} : vector<16x32xf32>, vector<32x128xf32>, vector<16x128xf32> -> vector<16x128xf32>
    %c0_4 = arith.constant 0 : index
    %c0_5 = arith.constant 0 : index
    %6 = vector.load %arg4[%c0_4, %c0_5] : memref<1x128xf32, #tpu.memory_space<vmem>>, vector<1x128xf32>
    %7 = vector.broadcast %6 : vector<1x128xf32> to vector<16x128xf32>
    %8 = arith.addf %5, %7 : vector<16x128xf32>
    %cst_6 = arith.constant 0.000000e+00 : f32
    %9 = vector.broadcast %cst_6 : f32 to vector<16x128xf32>
    %10 = arith.maximumf %8, %9 : vector<16x128xf32>
    %c0_7 = arith.constant 0 : index
    %c0_8 = arith.constant 0 : index
    %11 = vector.load %arg10[%c0_7, %c0_8] : memref<16x32xf32, #tpu.memory_space<vmem>>, vector<16x32xf32>
    %c0_9 = arith.constant 0 : index
    %c0_10 = arith.constant 0 : index
    %12 = vector.load %arg5[%c0_9, %c0_10] : memref<128x32xf32, #tpu.memory_space<vmem>>, vector<128x32xf32>
    %cst_11 = arith.constant dense<0.000000e+00> : vector<16x32xf32>
    %13 = tpu.matmul %10, %12, %cst_11 {dimension_numbers = #tpu.dot_dimension_numbers<[1], [0], [0], [1], [0, 0, 1, 1], [], []>} : vector<16x128xf32>, vector<128x32xf32>, vector<16x32xf32> -> vector<16x32xf32>
    %14 = arith.addf %11, %13 : vector<16x32xf32>
    %c0_12 = arith.constant 0 : index
    %c0_13 = arith.constant 0 : index
    %15 = vector.load %arg10[%c0_12, %c0_13] : memref<16x32xf32, #tpu.memory_space<vmem>>, vector<16x32xf32>
    tpu.vector_store %arg10[%c0_12, %c0_13], %14 {strides = array<i32>} : memref<16x32xf32, #tpu.memory_space<vmem>>, vector<16x32xf32>,
    %c0_i32_14 = arith.constant 0 : i32
    %16 = arith.cmpi eq, %arg1, %c0_i32_14 : i32
    %17 = arith.extui %16 : i1 to i32
    %c0_i32_15 = arith.constant 0 : i32
    %18 = arith.cmpi ne, %17, %c0_i32_15 : i32
    scf.if %18 {
      %c0_16 = arith.constant 0 : index
      %c0_17 = arith.constant 0 : index
      %19 = vector.load %arg10[%c0_16, %c0_17] : memref<16x32xf32, #tpu.memory_space<vmem>>, vector<16x32xf32>
      %c0_18 = arith.constant 0 : index
      %c0_19 = arith.constant 0 : index
      %20 = vector.load %arg6[%c0_18, %c0_19] : memref<1x32xf32, #tpu.memory_space<vmem>>, vector<1x32xf32>
      %21 = vector.broadcast %20 : vector<1x32xf32> to vector<16x32xf32>
      %22 = arith.addf %19, %21 : vector<16x32xf32>
      %c0_20 = arith.constant 0 : index
      %c0_21 = arith.constant 0 : index
      %23 = vector.load %arg2[%c0_20, %c0_21] : memref<16x32xf32, #tpu.memory_space<vmem>>, vector<16x32xf32>
      %24 = arith.addf %22, %23 : vector<16x32xf32>
      %cst_22 = arith.constant dense<0.000000e+00> : vector<16xf32>
      %25 = vector.multi_reduction <add>, %24, %cst_22 [1] : vector<16x32xf32> to vector<16xf32>
      %26 = vector.shape_cast %25 : vector<16xf32> to vector<16x1xf32>
      %cst_23 = arith.constant 3.200000e+01 : f32
      %27 = vector.broadcast %cst_23 : f32 to vector<16x1xf32>
      %28 = arith.divf %26, %27 : vector<16x1xf32>
      %29 = vector.broadcast %28 : vector<16x1xf32> to vector<16x32xf32>
      %30 = arith.subf %24, %29 : vector<16x32xf32>
      %31 = arith.mulf %30, %30 : vector<16x32xf32>
      %cst_24 = arith.constant dense<0.000000e+00> : vector<16xf32>
      %32 = vector.multi_reduction <add>, %31, %cst_24 [1] : vector<16x32xf32> to vector<16xf32>
      %33 = vector.shape_cast %32 : vector<16xf32> to vector<16x1xf32>
      %cst_25 = arith.constant 3.200000e+01 : f32
      %34 = vector.broadcast %cst_25 : f32 to vector<16x1xf32>
      %35 = arith.divf %33, %34 : vector<16x1xf32>
      %cst_26 = arith.constant 9.99999974E-6 : f32
      %36 = vector.broadcast %cst_26 : f32 to vector<16x1xf32>
      %37 = arith.addf %35, %36 : vector<16x1xf32>
      %38 = math.rsqrt %37 : vector<16x1xf32>
      %39 = vector.broadcast %38 : vector<16x1xf32> to vector<16x32xf32>
      %40 = arith.mulf %30, %39 : vector<16x32xf32>
      %c0_27 = arith.constant 0 : index
      %c0_28 = arith.constant 0 : index
      %41 = vector.load %arg7[%c0_27, %c0_28] : memref<1x32xf32, #tpu.memory_space<vmem>>, vector<1x32xf32>
      %42 = vector.broadcast %41 : vector<1x32xf32> to vector<16x32xf32>
      %43 = arith.mulf %40, %42 : vector<16x32xf32>
      %c0_29 = arith.constant 0 : index
      %c0_30 = arith.constant 0 : index
      %44 = vector.load %arg8[%c0_29, %c0_30] : memref<1x32xf32, #tpu.memory_space<vmem>>, vector<1x32xf32>
      %45 = vector.broadcast %44 : vector<1x32xf32> to vector<16x32xf32>
      %46 = arith.addf %43, %45 : vector<16x32xf32>
      %c0_31 = arith.constant 0 : index
      %c0_32 = arith.constant 0 : index
      %47 = vector.load %arg9[%c0_31, %c0_32] : memref<16x32xf32, #tpu.memory_space<vmem>>, vector<16x32xf32>
      tpu.vector_store %arg9[%c0_31, %c0_32], %46 {strides = array<i32>} : memref<16x32xf32, #tpu.memory_space<vmem>>, vector<16x32xf32>,
    } else {
    }
    return
  }
  func.func @transform_0(%arg0: i32, %arg1: i32) -> (i32, i32) {
    %c0_i32 = arith.constant 0 : i32
    %c0_i32_0 = arith.constant 0 : i32
    return %arg0, %c0_i32 : i32, i32
  }
  func.func @transform_1(%arg0: i32, %arg1: i32) -> (i32, i32) {
    %c0_i32 = arith.constant 0 : i32
    %c0_i32_0 = arith.constant 0 : i32
    return %c0_i32, %arg1 : i32, i32
  }
  func.func @transform_2(%arg0: i32, %arg1: i32) -> (i32, i32) {
    %c0_i32 = arith.constant 0 : i32
    %c0_i32_0 = arith.constant 0 : i32
    return %c0_i32, %arg1 : i32, i32
  }
  func.func @transform_3(%arg0: i32, %arg1: i32) -> (i32, i32) {
    %c0_i32 = arith.constant 0 : i32
    %c0_i32_0 = arith.constant 0 : i32
    return %arg1, %c0_i32 : i32, i32
  }
  func.func @transform_4(%arg0: i32, %arg1: i32) -> (i32, i32) {
    %c0_i32 = arith.constant 0 : i32
    %c0_i32_0 = arith.constant 0 : i32
    %c0_i32_1 = arith.constant 0 : i32
    return %c0_i32, %c0_i32_0 : i32, i32
  }
  func.func @transform_5(%arg0: i32, %arg1: i32) -> (i32, i32) {
    %c0_i32 = arith.constant 0 : i32
    %c0_i32_0 = arith.constant 0 : i32
    %c0_i32_1 = arith.constant 0 : i32
    return %c0_i32, %c0_i32_0 : i32, i32
  }
  func.func @transform_6(%arg0: i32, %arg1: i32) -> (i32, i32) {
    %c0_i32 = arith.constant 0 : i32
    %c0_i32_0 = arith.constant 0 : i32
    %c0_i32_1 = arith.constant 0 : i32
    return %c0_i32, %c0_i32_0 : i32, i32
  }
  func.func @transform_7(%arg0: i32, %arg1: i32) -> (i32, i32) {
    %c0_i32 = arith.constant 0 : i32
    %c0_i32_0 = arith.constant 0 : i32
    return %arg0, %c0_i32 : i32, i32
  }
}

</mosaic_0001>

<llo_original>
// kernel: transformer_block.4
$region0: #{transformer_block.4}
  #allocation0 [shape = 'u32[]', space=smem, size = 0x4, offset = 0x4, fixed_abs, tag = 'smem constant byte address 0x4 - core index']
  #allocation1 [shape = 'u32[144,128]{1,0:T(1,128)}', space=vmem, size = 0x12000, scoped, tag = 'internal scratch']
  %s0 = inlined_call_operand.vmem [shape: f32[16,32], index: 0, kind: input, shape index: {}]
  %s1 = inlined_call_operand.hbm [shape: f32[32,96], index: 1, kind: input, shape index: {}]
  %s2 = inlined_call_operand.vmem [shape: f32[1,96], index: 2, kind: input, shape index: {}]
  %s3 = inlined_call_operand.vmem [shape: f32[16,96], index: 3, kind: output, shape index: {}]
  %s4 = sld [smem:[#allocation0]]
  $region26: #{transformer_block.4} parent=0
    _
  %s6 = ssub.s32 1, %s4
  %s7 = scalar_select 0, %s6, %s4
  $region1: #{transformer_block.4} parent=0
    #allocation2 [shape = 'u8[16384]{0}', space=vmem, size = 0x4000, scoped, tag = 'input window, operand 1, single buffered']
    #allocation3 [shape = 's32[1]{0}', space=sflag, size = 0x4, scoped, tag = 'scoped memory for transformer_block.4']
    %8 = vsyncpa [#allocation3], 0
    // Predicated region
    $region2: #{transformer_block.4} parent=1 // pred_check
      _
    $region3: #{transformer_block.4} parent=1 // pred_check_branch
      %10 = sbr.rel (0) target = $region5
    $region4: #{transformer_block.4} parent=1 // pred_region
      _
    $region5: #{transformer_block.4} parent=1 // pred_fallthru
      _
    // Predicated region
    $region6: #{transformer_block.4} parent=1 // pred_check
      _
    $region7: #{transformer_block.4} parent=1 // pred_check_branch
      %12 = sbr.rel (0) target = $region9
    $region8: #{transformer_block.4} parent=1 // pred_region
      %s14 = ssub.s32 512, 512
      %15 = vsyncadd [#allocation3], %s14
      %s16 = sshll.u32 [#allocation2], 4
      %s17 = int_to_ptr.vmem [resolvable:$true] %s16
      %22 = dma.hbm_to_vmem [thread:$0]  %s1, 512, %s17, [#allocation3], 128, 128, 8
    $region9: #{transformer_block.4} parent=1 // pred_fallthru
      _
    // Predicated region
    $region10: #{transformer_block.4} parent=1 // pred_check
      _
    $region11: #{transformer_block.4} parent=1 // pred_check_branch
      %24 = sbr.rel (0) target = $region13
    $region12: #{transformer_block.4} parent=1 // pred_region
      _
    $region13: #{transformer_block.4} parent=1 // pred_fallthru
      _
    // Predicated region
    $region14: #{transformer_block.4} parent=1 // pred_check
      _
    $region15: #{transformer_block.4} parent=1 // pred_check_branch
      %26 = sbr.rel (0) target = $region17
    $region16: #{transformer_block.4} parent=1 // pred_region
      %27 = dma.done [#allocation3], 512
    $region17: #{transformer_block.4} parent=1 // pred_fallthru
      _
    %v28 = vld [vmem:[%s0] sm:$0xff]
    %v29 = vld [vmem:[%s0 + $0x8] sm:$0xff]
    %v30 = vld [vmem:[#allocation2] sm:$0xff]
    %v31 = vld [vmem:[#allocation2 + $0x8] sm:$0xff]
    %v32 = vld [vmem:[#allocation2 + $0x10] sm:$0xff]
    %v33 = vld [vmem:[#allocation2 + $0x18] sm:$0xff]
    %v34 = vld [vmem:[%s2] sm:$0x1]
    %v36 = vlaneseq
    %v37 = vshrl.u32 %v36, 7
    %v38 = vsub.s32 0, %v37
    %v39 = vrot.slane %v34, %v38
    %vm41 = vcmask 261120
    %v43 = vsel %vm41, %v28, 0
    %v46 = vsel %vm41, %v29, 0
    %48 = vmatprep.subr.mxu0 0.0
    %49 = vmatpush1.msra.mxu0 0.0
    %50 = vmatprep.subr.mxu0 0.0
    %51 = vmatpush1.msra.mxu0 0.0
    %52 = vmatprep.subr.mxu0 0.0
    %53 = vmatpush1.msra.mxu0 0.0
    %54 = vmatprep.subr.mxu0 0.0
    %55 = vmatpush1.msra.mxu0 0.0
    %56 = vmatprep.subr.mxu0 0.0
    %57 = vmatpush1.msra.mxu0 0.0
    %58 = vmatprep.subr.mxu0 0.0
    %59 = vmatpush1.msra.mxu0 0.0
    %60 = vmatprep.subr.mxu0 0.0
    %61 = vmatpush1.msra.mxu0 0.0
    %62 = vmatprep.subr.mxu0 0.0
    %63 = vmatpush1.msra.mxu0 0.0
    %64 = vmatprep.subr.mxu0 0.0
    %65 = vmatpush1.msra.mxu0 0.0
    %66 = vmatprep.subr.mxu0 0.0
    %67 = vmatpush1.msra.mxu0 0.0
    %68 = vmatprep.subr.mxu0 0.0
    %69 = vmatpush1.msra.mxu0 0.0
    %70 = vmatprep.subr.mxu0 0.0
    %71 = vmatpush1.msra.mxu0 0.0
    %72 = vmatprep.subr.mxu0 0.0
    %73 = vmatpush1.msra.mxu0 %v33
    %74 = vmatprep.subr.mxu0 0.0
    %75 = vmatpush1.msra.mxu0 %v32
    %76 = vmatprep.subr.mxu0 0.0
    %77 = vmatpush1.msra.mxu0 %v31
    %78 = vmatprep.subr.mxu0 0.0
    %79 = vmatpush1.msra.mxu0 %v30
    %80 = vmatprep.subr.mxu0 0.0
    %81 = vmatpush2.msra.mxu0 0.0
    %82 = vmatprep.subr.mxu0 0.0
    %83 = vmatpush2.msra.mxu0 0.0
    %84 = vmatprep.subr.mxu0 0.0
    %85 = vmatpush2.msra.mxu0 0.0
    %86 = vmatprep.subr.mxu0 0.0
    %87 = vmatpush2.msra.mxu0 0.0
    %88 = vmatprep.subr.mxu0 0.0
    %89 = vmatpush2.msra.mxu0 0.0
    %90 = vmatprep.subr.mxu0 0.0
    %91 = vmatpush2.msra.mxu0 0.0
    %92 = vmatprep.subr.mxu0 0.0
    %93 = vmatpush2.msra.mxu0 0.0
    %94 = vmatprep.subr.mxu0 0.0
    %95 = vmatpush2.msra.mxu0 0.0
    %96 = vmatprep.subr.mxu0 0.0
    %97 = vmatpush2.msra.mxu0 0.0
    %98 = vmatprep.subr.mxu0 0.0
    %99 = vmatpush2.msra.mxu0 0.0
    %100 = vmatprep.subr.mxu0 0.0
    %101 = vmatpush2.msra.mxu0 0.0
    %102 = vmatprep.subr.mxu0 0.0
    %103 = vmatpush2.msra.mxu0 0.0
    %104 = vmatprep.subr.mxu0 0.0
    %105 = vmatpush2.msra.mxu0 0.0
    %106 = vmatprep.subr.mxu0 0.0
    %107 = vmatpush2.msra.mxu0 0.0
    %108 = vmatprep.subr.mxu0 0.0
    %109 = vmatpush2.msra.mxu0 0.0
    %110 = vmatprep.subr.mxu0 0.0
    %111 = vmatpush2.msra.mxu0 0.0
    %112 = vmatprep.mubr.f32.mxu0 0.0
    %113 = vmatmul.mubr.f32.gmra.mxu0 %v43
    %v114 = vpop.f32.mrf.mxu0
    %v115 = vadd.f32 %v39, %v114
    %v116 = vpop.f32.mrf.mxu0
    %117 = vmatprep.mubr.f32.mxu0 0.0
    %118 = vmatmul.mubr.f32.gmra.mxu0 %v46
    %v119 = vpop.f32.mrf.mxu0
    %v120 = vadd.f32 %v39, %v119
    %v121 = vpop.f32.mrf.mxu0
    %122 = vdwg.mxu0
    %vm123 = vcmask 785408
    %124 = vst.msk [vmem:[%s3] sm:$0xff] %vm123, %v115
    %125 = vst.msk [vmem:[%s3 + $0x8] sm:$0xff] %vm123, %v120
    // Predicated region
    $region18: #{transformer_block.4} parent=1 // pred_check
      _
    $region19: #{transformer_block.4} parent=1 // pred_check_branch
      %127 = sbr.rel (0) target = $region21
    $region20: #{transformer_block.4} parent=1 // pred_region
      _
    $region21: #{transformer_block.4} parent=1 // pred_fallthru
      _
    // Predicated region
    $region22: #{transformer_block.4} parent=1 // pred_check
      _
    $region23: #{transformer_block.4} parent=1 // pred_check_branch
      %129 = sbr.rel (0) target = $region25
    $region24: #{transformer_block.4} parent=1 // pred_region
      _
    $region25: #{transformer_block.4} parent=1 // pred_fallthru
      _
    %130 = vsyncpa [#allocation3], 1

// kernel: transformer_block.6
$region0: #{transformer_block.6}
  #allocation0 [shape = 'u32[]', space=smem, size = 0x4, offset = 0x4, fixed_abs, tag = 'smem constant byte address 0x4 - core index']
  #allocation1 [shape = 'u32[144,128]{1,0:T(1,128)}', space=vmem, size = 0x12000, scoped, tag = 'internal scratch']
  %s0 = inlined_call_operand.vmem [shape: f32[16,32], index: 0, kind: input, shape index: {}]
  %s1 = inlined_call_operand.vmem [shape: f32[32,32], index: 1, kind: input, shape index: {}]
  %s2 = inlined_call_operand.vmem [shape: f32[1,32], index: 2, kind: input, shape index: {}]
  %s3 = inlined_call_operand.vmem [shape: f32[16,32], index: 3, kind: input, shape index: {}]
  %s4 = inlined_call_operand.vmem [shape: f32[1,32], index: 4, kind: input, shape index: {}]
  %s5 = inlined_call_operand.vmem [shape: f32[1,32], index: 5, kind: input, shape index: {}]
  %s6 = inlined_call_operand.vmem [shape: f32[16,32], index: 6, kind: output, shape index: {}]
  %s7 = sld [smem:[#allocation0]]
  $region34: #{transformer_block.6} parent=0
    _
  %s9 = ssub.s32 1, %s7
  %s10 = scalar_select 0, %s9, %s7
  // Predicated region
  $region2: #{transformer_block.6} parent=0 // pred_check
    _
  $region3: #{transformer_block.6} parent=0 // pred_check_branch
    %12 = sbr.rel (0) target = $region5
  $region4: #{transformer_block.6} parent=0 // pred_region
    _
  $region5: #{transformer_block.6} parent=0 // pred_fallthru
    _
  // Predicated region
  $region6: #{transformer_block.6} parent=0 // pred_check
    _
  $region7: #{transformer_block.6} parent=0 // pred_check_branch
    %14 = sbr.rel (0) target = $region9
  $region8: #{transformer_block.6} parent=0 // pred_region
    _
  $region9: #{transformer_block.6} parent=0 // pred_fallthru
    _
  // Predicated region
  $region10: #{transformer_block.6} parent=0 // pred_check
    _
  $region11: #{transformer_block.6} parent=0 // pred_check_branch
    %16 = sbr.rel (0) target = $region13
  $region12: #{transformer_block.6} parent=0 // pred_region
    _
  $region13: #{transformer_block.6} parent=0 // pred_fallthru
    _
  // Predicated region
  $region14: #{transformer_block.6} parent=0 // pred_check
    _
  $region15: #{transformer_block.6} parent=0 // pred_check_branch
    %18 = sbr.rel (0) target = $region17
  $region16: #{transformer_block.6} parent=0 // pred_region
    _
  $region17: #{transformer_block.6} parent=0 // pred_fallthru
    _
  // Predicated region
  $region18: #{transformer_block.6} parent=0 // pred_check
    _
  $region19: #{transformer_block.6} parent=0 // pred_check_branch
    %20 = sbr.rel (0) target = $region21
  $region20: #{transformer_block.6} parent=0 // pred_region
    _
  $region21: #{transformer_block.6} parent=0 // pred_fallthru
    _
  // Predicated region
  $region22: #{transformer_block.6} parent=0 // pred_check
    _
  $region23: #{transformer_block.6} parent=0 // pred_check_branch
    %22 = sbr.rel (0) target = $region25
  $region24: #{transformer_block.6} parent=0 // pred_region
    _
  $region25: #{transformer_block.6} parent=0 // pred_fallthru
    _
  %v23 = vld [vmem:[%s0] sm:$0xff]
  %v24 = vld [vmem:[%s0 + $0x8] sm:$0xff]
  %v25 = vld [vmem:[%s1] sm:$0xff]
  %v26 = vld [vmem:[%s1 + $0x8] sm:$0xff]
  %v27 = vld [vmem:[%s1 + $0x10] sm:$0xff]
  %v28 = vld [vmem:[%s1 + $0x18] sm:$0xff]
  %v29 = vld [vmem:[%s2] sm:$0x1]
  %v31 = vlaneseq
  %v32 = vshrl.u32 %v31, 7
  %v33 = vsub.s32 0, %v32
  %v34 = vrot.slane %v29, %v33
  %vm36 = vcmask 261120
  %v38 = vsel %vm36, %v23, 0
  %v41 = vsel %vm36, %v24, 0
  %43 = vmatprep.subr.mxu0 0.0
  %44 = vmatpush1.msra.mxu0 0.0
  %45 = vmatprep.subr.mxu0 0.0
  %46 = vmatpush1.msra.mxu0 0.0
  %47 = vmatprep.subr.mxu0 0.0
  %48 = vmatpush1.msra.mxu0 0.0
  %49 = vmatprep.subr.mxu0 0.0
  %50 = vmatpush1.msra.mxu0 0.0
  %51 = vmatprep.subr.mxu0 0.0
  %52 = vmatpush1.msra.mxu0 0.0
  %53 = vmatprep.subr.mxu0 0.0
  %54 = vmatpush1.msra.mxu0 0.0
  %55 = vmatprep.subr.mxu0 0.0
  %56 = vmatpush1.msra.mxu0 0.0
  %57 = vmatprep.subr.mxu0 0.0
  %58 = vmatpush1.msra.mxu0 0.0
  %59 = vmatprep.subr.mxu0 0.0
  %60 = vmatpush1.msra.mxu0 0.0
  %61 = vmatprep.subr.mxu0 0.0
  %62 = vmatpush1.msra.mxu0 0.0
  %63 = vmatprep.subr.mxu0 0.0
  %64 = vmatpush1.msra.mxu0 0.0
  %65 = vmatprep.subr.mxu0 0.0
  %66 = vmatpush1.msra.mxu0 0.0
  %67 = vmatprep.subr.mxu0 0.0
  %68 = vmatpush1.msra.mxu0 %v28
  %69 = vmatprep.subr.mxu0 0.0
  %70 = vmatpush1.msra.mxu0 %v27
  %71 = vmatprep.subr.mxu0 0.0
  %72 = vmatpush1.msra.mxu0 %v26
  %73 = vmatprep.subr.mxu0 0.0
  %74 = vmatpush1.msra.mxu0 %v25
  %75 = vmatprep.subr.mxu0 0.0
  %76 = vmatpush2.msra.mxu0 0.0
  %77 = vmatprep.subr.mxu0 0.0
  %78 = vmatpush2.msra.mxu0 0.0
  %79 = vmatprep.subr.mxu0 0.0
  %80 = vmatpush2.msra.mxu0 0.0
  %81 = vmatprep.subr.mxu0 0.0
  %82 = vmatpush2.msra.mxu0 0.0
  %83 = vmatprep.subr.mxu0 0.0
  %84 = vmatpush2.msra.mxu0 0.0
  %85 = vmatprep.subr.mxu0 0.0
  %86 = vmatpush2.msra.mxu0 0.0
  %87 = vmatprep.subr.mxu0 0.0
  %88 = vmatpush2.msra.mxu0 0.0
  %89 = vmatprep.subr.mxu0 0.0
  %90 = vmatpush2.msra.mxu0 0.0
  %91 = vmatprep.subr.mxu0 0.0
  %92 = vmatpush2.msra.mxu0 0.0
  %93 = vmatprep.subr.mxu0 0.0
  %94 = vmatpush2.msra.mxu0 0.0
  %95 = vmatprep.subr.mxu0 0.0
  %96 = vmatpush2.msra.mxu0 0.0
  %97 = vmatprep.subr.mxu0 0.0
  %98 = vmatpush2.msra.mxu0 0.0
  %99 = vmatprep.subr.mxu0 0.0
  %100 = vmatpush2.msra.mxu0 0.0
  %101 = vmatprep.subr.mxu0 0.0
  %102 = vmatpush2.msra.mxu0 0.0
  %103 = vmatprep.subr.mxu0 0.0
  %104 = vmatpush2.msra.mxu0 0.0
  %105 = vmatprep.subr.mxu0 0.0
  %106 = vmatpush2.msra.mxu0 0.0
  %107 = vmatprep.mubr.f32.mxu0 0.0
  %108 = vmatmul.mubr.f32.gmra.mxu0 %v38
  %v109 = vpop.f32.mrf.mxu0
  %v110 = vadd.f32 %v34, %v109
  %v111 = vpop.f32.mrf.mxu0
  %112 = vmatprep.mubr.f32.mxu0 0.0
  %113 = vmatmul.mubr.f32.gmra.mxu0 %v41
  %v114 = vpop.f32.mrf.mxu0
  %v115 = vadd.f32 %v34, %v114
  %v116 = vpop.f32.mrf.mxu0
  %117 = vdwg.mxu0
  %v118 = vld [vmem:[%s3] sm:$0xff]
  %v119 = vld [vmem:[%s3 + $0x8] sm:$0xff]
  %v120 = vadd.f32 %v110, %v118
  %v121 = vadd.f32 %v115, %v119
  %v122 = vsel %vm36, %v120, 0.0
  %123 = vadd.xlane.f32.xlu0 %v122
  %v124 = vpop.xlane.xlu0 %123
  %v125 = vsel %vm36, %v121, 0.0
  %126 = vadd.xlane.f32.xlu0 %v125
  %v127 = vpop.xlane.xlu0 %126
  %v128 = vrcp.pop 32.0
  %v129 = vmul.f32 %v124, %v128
  %v130 = vmul.f32 %v127, %v128
  %v131 = vsub.f32 %v120, %v129
  %v132 = vsub.f32 %v121, %v130
  %v133 = vmul.f32 %v131, %v131
  %v134 = vmul.f32 %v132, %v132
  %v135 = vsel %vm36, %v133, 0.0
  %136 = vadd.xlane.f32.xlu0 %v135
  %v137 = vpop.xlane.xlu0 %136
  %v138 = vsel %vm36, %v134, 0.0
  %139 = vadd.xlane.f32.xlu0 %v138
  %v140 = vpop.xlane.xlu0 %139
  %v141 = vmul.f32 %v137, %v128
  %v142 = vmul.f32 %v140, %v128
  %v143 = vadd.f32 %v141, 1e-05
  %v144 = vadd.f32 %v142, 1e-05
  %v145 = vrsqrt.pop %v143
  %v146 = vrsqrt.pop %v144
  %v147 = vmul.f32 %v131, %v145
  %v148 = vmul.f32 %v132, %v146
  %v149 = vld [vmem:[%s4] sm:$0x1]
  %v151 = vlaneseq
  %v152 = vshrl.u32 %v151, 7
  %v153 = vsub.s32 0, %v152
  %v154 = vrot.slane %v149, %v153
  %v156 = vmul.f32 %v147, %v154
  %v157 = vmul.f32 %v148, %v154
  %v158 = vld [vmem:[%s5] sm:$0x1]
  %v160 = vlaneseq
  %v161 = vshrl.u32 %v160, 7
  %v162 = vsub.s32 0, %v161
  %v163 = vrot.slane %v158, %v162
  %v165 = vadd.f32 %v156, %v163
  %v166 = vadd.f32 %v157, %v163
  %167 = vst.msk [vmem:[%s6] sm:$0xff] %vm36, %v165
  %168 = vst.msk [vmem:[%s6 + $0x8] sm:$0xff] %vm36, %v166
  // Predicated region
  $region26: #{transformer_block.6} parent=0 // pred_check
    _
  $region27: #{transformer_block.6} parent=0 // pred_check_branch
    %170 = sbr.rel (0) target = $region29
  $region28: #{transformer_block.6} parent=0 // pred_region
    _
  $region29: #{transformer_block.6} parent=0 // pred_fallthru
    _
  // Predicated region
  $region30: #{transformer_block.6} parent=0 // pred_check
    _
  $region31: #{transformer_block.6} parent=0 // pred_check_branch
    %172 = sbr.rel (0) target = $region33
  $region32: #{transformer_block.6} parent=0 // pred_region
    _
  $region33: #{transformer_block.6} parent=0 // pred_fallthru
    _

// kernel: transformer_block.7
$region0: #{transformer_block.7}
  #allocation0 [shape = 'u32[]', space=smem, size = 0x4, offset = 0x4, fixed_abs, tag = 'smem constant byte address 0x4 - core index']
  #allocation1 [shape = 'u32[144,128]{1,0:T(1,128)}', space=vmem, size = 0x12000, scoped, tag = 'internal scratch']
  #allocation2 [shape = 'f32[16,32]{1,0:T(8,128)}', space=vmem, size = 0x2000, scoped, tag = 'scratch operand']
  %s0 = inlined_call_operand.vmem [shape: f32[16,32], index: 0, kind: input, shape index: {}]
  %s1 = inlined_call_operand.vmem [shape: f32[32,128], index: 1, kind: input, shape index: {}]
  %s2 = inlined_call_operand.vmem [shape: f32[1,128], index: 2, kind: input, shape index: {}]
  %s3 = inlined_call_operand.vmem [shape: f32[128,32], index: 3, kind: input, shape index: {}]
  %s4 = inlined_call_operand.vmem [shape: f32[1,32], index: 4, kind: input, shape index: {}]
  %s5 = inlined_call_operand.vmem [shape: f32[1,32], index: 5, kind: input, shape index: {}]
  %s6 = inlined_call_operand.vmem [shape: f32[1,32], index: 6, kind: input, shape index: {}]
  %s7 = inlined_call_operand.hbm [shape: f32[16,32], index: 7, kind: output, shape index: {}]
  %s8 = sld [smem:[#allocation0]]
  $region46: #{transformer_block.7} parent=0
    _
  %s10 = ssub.s32 1, %s8
  %s11 = scalar_select 0, %s10, %s8
  $region1: #{transformer_block.7} parent=0
    #allocation3 [shape = 'u8[8192]{0}', space=vmem, size = 0x2000, scoped, tag = 'output window, operand 0, single buffered']
    #allocation4 [shape = 's32[1]{0}', space=sflag, size = 0x4, scoped, tag = 'scoped memory for transformer_block.7']
    %12 = vsyncpa [#allocation4], 0
    // Predicated region
    $region2: #{transformer_block.7} parent=1 // pred_check
      _
    $region3: #{transformer_block.7} parent=1 // pred_check_branch
      %14 = sbr.rel (0) target = $region5
    $region4: #{transformer_block.7} parent=1 // pred_region
      _
    $region5: #{transformer_block.7} parent=1 // pred_fallthru
      _
    // Predicated region
    $region6: #{transformer_block.7} parent=1 // pred_check
      _
    $region7: #{transformer_block.7} parent=1 // pred_check_branch
      %16 = sbr.rel (0) target = $region9
    $region8: #{transformer_block.7} parent=1 // pred_region
      _
    $region9: #{transformer_block.7} parent=1 // pred_fallthru
      _
    // Predicated region
    $region10: #{transformer_block.7} parent=1 // pred_check
      _
    $region11: #{transformer_block.7} parent=1 // pred_check_branch
      %18 = sbr.rel (0) target = $region13
    $region12: #{transformer_block.7} parent=1 // pred_region
      _
    $region13: #{transformer_block.7} parent=1 // pred_fallthru
      _
    // Predicated region
    $region14: #{transformer_block.7} parent=1 // pred_check
      _
    $region15: #{transformer_block.7} parent=1 // pred_check_branch
      %20 = sbr.rel (0) target = $region17
    $region16: #{transformer_block.7} parent=1 // pred_region
      _
    $region17: #{transformer_block.7} parent=1 // pred_fallthru
      _
    // Predicated region
    $region18: #{transformer_block.7} parent=1 // pred_check
      _
    $region19: #{transformer_block.7} parent=1 // pred_check_branch
      %22 = sbr.rel (0) target = $region21
    $region20: #{transformer_block.7} parent=1 // pred_region
      _
    $region21: #{transformer_block.7} parent=1 // pred_fallthru
      _
    // Predicated region
    $region22: #{transformer_block.7} parent=1 // pred_check
      _
    $region23: #{transformer_block.7} parent=1 // pred_check_branch
      %24 = sbr.rel (0) target = $region25
    $region24: #{transformer_block.7} parent=1 // pred_region
      _
    $region25: #{transformer_block.7} parent=1 // pred_fallthru
      _
    // Predicated region
    $region26: #{transformer_block.7} parent=1 // pred_check
      _
    $region27: #{transformer_block.7} parent=1 // pred_check_branch
      %26 = sbr.rel (0) target = $region29
    $region28: #{transformer_block.7} parent=1 // pred_region
      _
    $region29: #{transformer_block.7} parent=1 // pred_fallthru
      _
    %p27 = scmp.eq.s32.totalorder 0, 0
    // Predicated region
    $region30: #{transformer_block.7} parent=1 // pred_check
      %p28 = pneg %p27
    $region31: #{transformer_block.7} parent=1 // pred_check_branch
      %30 = sbr.rel (%p28) target = $region33
    $region32: #{transformer_block.7} parent=1 // pred_region
      %vm31 = vcmask 261120
      %32 = vst.msk [vmem:[#allocation2] sm:$0xff] %vm31, 0.0
      %33 = vst.msk [vmem:[#allocation2 + $0x8] sm:$0xff] %vm31, 0.0
    $region33: #{transformer_block.7} parent=1 // pred_fallthru
      _
    %v34 = vld [vmem:[%s0] sm:$0xff]
    %v35 = vld [vmem:[%s0 + $0x8] sm:$0xff]
    %v36 = vld [vmem:[%s1] sm:$0xff]
    %v37 = vld [vmem:[%s1 + $0x8] sm:$0xff]
    %v38 = vld [vmem:[%s1 + $0x10] sm:$0xff]
    %v39 = vld [vmem:[%s1 + $0x18] sm:$0xff]
    %v40 = vld [vmem:[%s2] sm:$0x1]
    %v42 = vlaneseq
    %v43 = vshrl.u32 %v42, 7
    %v44 = vsub.s32 0, %v43
    %v45 = vrot.slane %v40, %v44
    %vm47 = vcmask 261120
    %v49 = vsel %vm47, %v34, 0
    %v52 = vsel %vm47, %v35, 0
    %54 = vmatprep.subr.mxu0 0.0
    %55 = vmatpush1.msra.mxu0 0.0
    %56 = vmatprep.subr.mxu0 0.0
    %57 = vmatpush1.msra.mxu0 0.0
    %58 = vmatprep.subr.mxu0 0.0
    %59 = vmatpush1.msra.mxu0 0.0
    %60 = vmatprep.subr.mxu0 0.0
    %61 = vmatpush1.msra.mxu0 0.0
    %62 = vmatprep.subr.mxu0 0.0
    %63 = vmatpush1.msra.mxu0 0.0
    %64 = vmatprep.subr.mxu0 0.0
    %65 = vmatpush1.msra.mxu0 0.0
    %66 = vmatprep.subr.mxu0 0.0
    %67 = vmatpush1.msra.mxu0 0.0
    %68 = vmatprep.subr.mxu0 0.0
    %69 = vmatpush1.msra.mxu0 0.0
    %70 = vmatprep.subr.mxu0 0.0
    %71 = vmatpush1.msra.mxu0 0.0
    %72 = vmatprep.subr.mxu0 0.0
    %73 = vmatpush1.msra.mxu0 0.0
    %74 = vmatprep.subr.mxu0 0.0
    %75 = vmatpush1.msra.mxu0 0.0
    %76 = vmatprep.subr.mxu0 0.0
    %77 = vmatpush1.msra.mxu0 0.0
    %78 = vmatprep.subr.mxu0 0.0
    %79 = vmatpush1.msra.mxu0 %v39
    %80 = vmatprep.subr.mxu0 0.0
    %81 = vmatpush1.msra.mxu0 %v38
    %82 = vmatprep.subr.mxu0 0.0
    %83 = vmatpush1.msra.mxu0 %v37
    %84 = vmatprep.subr.mxu0 0.0
    %85 = vmatpush1.msra.mxu0 %v36
    %86 = vmatprep.subr.mxu0 0.0
    %87 = vmatpush2.msra.mxu0 0.0
    %88 = vmatprep.subr.mxu0 0.0
    %89 = vmatpush2.msra.mxu0 0.0
    %90 = vmatprep.subr.mxu0 0.0
    %91 = vmatpush2.msra.mxu0 0.0
    %92 = vmatprep.subr.mxu0 0.0
    %93 = vmatpush2.msra.mxu0 0.0
    %94 = vmatprep.subr.mxu0 0.0
    %95 = vmatpush2.msra.mxu0 0.0
    %96 = vmatprep.subr.mxu0 0.0
    %97 = vmatpush2.msra.mxu0 0.0
    %98 = vmatprep.subr.mxu0 0.0
    %99 = vmatpush2.msra.mxu0 0.0
    %100 = vmatprep.subr.mxu0 0.0
    %101 = vmatpush2.msra.mxu0 0.0
    %102 = vmatprep.subr.mxu0 0.0
    %103 = vmatpush2.msra.mxu0 0.0
    %104 = vmatprep.subr.mxu0 0.0
    %105 = vmatpush2.msra.mxu0 0.0
    %106 = vmatprep.subr.mxu0 0.0
    %107 = vmatpush2.msra.mxu0 0.0
    %108 = vmatprep.subr.mxu0 0.0
    %109 = vmatpush2.msra.mxu0 0.0
    %110 = vmatprep.subr.mxu0 0.0
    %111 = vmatpush2.msra.mxu0 0.0
    %112 = vmatprep.subr.mxu0 0.0
    %113 = vmatpush2.msra.mxu0 0.0
    %114 = vmatprep.subr.mxu0 0.0
    %115 = vmatpush2.msra.mxu0 0.0
    %116 = vmatprep.subr.mxu0 0.0
    %117 = vmatpush2.msra.mxu0 0.0
    %118 = vmatprep.mubr.f32.mxu0 0.0
    %119 = vmatmul.mubr.f32.gmra.mxu0 %v49
    %v120 = vpop.f32.mrf.mxu0
    %v121 = vadd.f32 %v45, %v120
    %v122 = vpop.f32.mrf.mxu0
    %123 = vmatprep.mubr.f32.mxu0 0.0
    %124 = vmatmul.mubr.f32.gmra.mxu0 %v52
    %v125 = vpop.f32.mrf.mxu0
    %v126 = vadd.f32 %v45, %v125
    %v127 = vpop.f32.mrf.mxu0
    %128 = vdwg.mxu0
    %v129 = vmax.f32 %v121, 0.0
    %v130 = vmax.f32 %v126, 0.0
    %v131 = vld [vmem:[#allocation2] sm:$0xff]
    %v132 = vld [vmem:[#allocation2 + $0x8] sm:$0xff]
    %v133 = vld [vmem:[%s3] sm:$0xff]
    %v134 = vld [vmem:[%s3 + $0x8] sm:$0xff]
    %v135 = vld [vmem:[%s3 + $0x10] sm:$0xff]
    %v136 = vld [vmem:[%s3 + $0x18] sm:$0xff]
    %v137 = vld [vmem:[%s3 + $0x20] sm:$0xff]
    %v138 = vld [vmem:[%s3 + $0x28] sm:$0xff]
    %v139 = vld [vmem:[%s3 + $0x30] sm:$0xff]
    %v140 = vld [vmem:[%s3 + $0x38] sm:$0xff]
    %v141 = vld [vmem:[%s3 + $0x40] sm:$0xff]
    %v142 = vld [vmem:[%s3 + $0x48] sm:$0xff]
    %v143 = vld [vmem:[%s3 + $0x50] sm:$0xff]
    %v144 = vld [vmem:[%s3 + $0x58] sm:$0xff]
    %v145 = vld [vmem:[%s3 + $0x60] sm:$0xff]
    %v146 = vld [vmem:[%s3 + $0x68] sm:$0xff]
    %v147 = vld [vmem:[%s3 + $0x70] sm:$0xff]
    %v148 = vld [vmem:[%s3 + $0x78] sm:$0xff]
    %149 = vmatprep.subr.mxu0 0.0
    %150 = vmatpush1.msra.mxu0 %v148
    %151 = vmatprep.subr.mxu0 0.0
    %152 = vmatpush1.msra.mxu0 %v147
    %153 = vmatprep.subr.mxu0 0.0
    %154 = vmatpush1.msra.mxu0 %v146
    %155 = vmatprep.subr.mxu0 0.0
    %156 = vmatpush1.msra.mxu0 %v145
    %157 = vmatprep.subr.mxu0 0.0
    %158 = vmatpush1.msra.mxu0 %v144
    %159 = vmatprep.subr.mxu0 0.0
    %160 = vmatpush1.msra.mxu0 %v143
    %161 = vmatprep.subr.mxu0 0.0
    %162 = vmatpush1.msra.mxu0 %v142
    %163 = vmatprep.subr.mxu0 0.0
    %164 = vmatpush1.msra.mxu0 %v141
    %165 = vmatprep.subr.mxu0 0.0
    %166 = vmatpush1.msra.mxu0 %v140
    %167 = vmatprep.subr.mxu0 0.0
    %168 = vmatpush1.msra.mxu0 %v139
    %169 = vmatprep.subr.mxu0 0.0
    %170 = vmatpush1.msra.mxu0 %v138
    %171 = vmatprep.subr.mxu0 0.0
    %172 = vmatpush1.msra.mxu0 %v137
    %173 = vmatprep.subr.mxu0 0.0
    %174 = vmatpush1.msra.mxu0 %v136
    %175 = vmatprep.subr.mxu0 0.0
    %176 = vmatpush1.msra.mxu0 %v135
    %177 = vmatprep.subr.mxu0 0.0
    %178 = vmatpush1.msra.mxu0 %v134
    %179 = vmatprep.subr.mxu0 0.0
    %180 = vmatpush1.msra.mxu0 %v133
    %181 = vmatprep.subr.mxu0 0.0
    %182 = vmatpush2.msra.mxu0 0.0
    %183 = vmatprep.subr.mxu0 0.0
    %184 = vmatpush2.msra.mxu0 0.0
    %185 = vmatprep.subr.mxu0 0.0
    %186 = vmatpush2.msra.mxu0 0.0
    %187 = vmatprep.subr.mxu0 0.0
    %188 = vmatpush2.msra.mxu0 0.0
    %189 = vmatprep.subr.mxu0 0.0
    %190 = vmatpush2.msra.mxu0 0.0
    %191 = vmatprep.subr.mxu0 0.0
    %192 = vmatpush2.msra.mxu0 0.0
    %193 = vmatprep.subr.mxu0 0.0
    %194 = vmatpush2.msra.mxu0 0.0
    %195 = vmatprep.subr.mxu0 0.0
    %196 = vmatpush2.msra.mxu0 0.0
    %197 = vmatprep.subr.mxu0 0.0
    %198 = vmatpush2.msra.mxu0 0.0
    %199 = vmatprep.subr.mxu0 0.0
    %200 = vmatpush2.msra.mxu0 0.0
    %201 = vmatprep.subr.mxu0 0.0
    %202 = vmatpush2.msra.mxu0 0.0
    %203 = vmatprep.subr.mxu0 0.0
    %204 = vmatpush2.msra.mxu0 0.0
    %205 = vmatprep.subr.mxu0 0.0
    %206 = vmatpush2.msra.mxu0 0.0
    %207 = vmatprep.subr.mxu0 0.0
    %208 = vmatpush2.msra.mxu0 0.0
    %209 = vmatprep.subr.mxu0 0.0
    %210 = vmatpush2.msra.mxu0 0.0
    %211 = vmatprep.subr.mxu0 0.0
    %212 = vmatpush2.msra.mxu0 0.0
    %213 = vmatprep.mubr.f32.mxu0 0.0
    %214 = vmatmul.mubr.f32.gmra.mxu0 %v129
    %v215 = vpop.f32.mrf.mxu0
    %v216 = vadd.f32 0.0, %v215
    %v217 = vpop.f32.mrf.mxu0
    %218 = vmatprep.mubr.f32.mxu0 0.0
    %219 = vmatmul.mubr.f32.gmra.mxu0 %v130
    %v220 = vpop.f32.mrf.mxu0
    %v221 = vadd.f32 0.0, %v220
    %v222 = vpop.f32.mrf.mxu0
    %223 = vdwg.mxu0
    %v224 = vadd.f32 %v131, %v216
    %v225 = vadd.f32 %v132, %v221
    %226 = vst.msk [vmem:[#allocation2] sm:$0xff] %vm47, %v224
    %227 = vst.msk [vmem:[#allocation2 + $0x8] sm:$0xff] %vm47, %v225
    // Predicated region
    $region34: #{transformer_block.7} parent=1 // pred_check
      %p228 = pneg %p27
    $region35: #{transformer_block.7} parent=1 // pred_check_branch
      %230 = sbr.rel (%p228) target = $region37
    $region36: #{transformer_block.7} parent=1 // pred_region
      %v231 = vld [vmem:[#allocation2] sm:$0xff]
      %v232 = vld [vmem:[#allocation2 + $0x8] sm:$0xff]
      %v233 = vld [vmem:[%s4] sm:$0x1]
      %v235 = vlaneseq
      %v236 = vshrl.u32 %v235, 7
      %v237 = vsub.s32 0, %v236
      %v238 = vrot.slane %v233, %v237
      %v240 = vadd.f32 %v231, %v238
      %v241 = vadd.f32 %v232, %v238
      %v242 = vld [vmem:[%s0] sm:$0xff]
      %v243 = vld [vmem:[%s0 + $0x8] sm:$0xff]
      %v244 = vadd.f32 %v240, %v242
      %v245 = vadd.f32 %v241, %v243
      %v246 = vsel %vm47, %v244, 0.0
      %247 = vadd.xlane.f32.xlu0 %v246
      %v248 = vpop.xlane.xlu0 %247
      %v249 = vsel %vm47, %v245, 0.0
      %250 = vadd.xlane.f32.xlu0 %v249
      %v251 = vpop.xlane.xlu0 %250
      %v252 = vrcp.pop 32.0
      %v253 = vmul.f32 %v248, %v252
      %v254 = vmul.f32 %v251, %v252
      %v255 = vsub.f32 %v244, %v253
      %v256 = vsub.f32 %v245, %v254
      %v257 = vmul.f32 %v255, %v255
      %v258 = vmul.f32 %v256, %v256
      %v259 = vsel %vm47, %v257, 0.0
      %260 = vadd.xlane.f32.xlu0 %v259
      %v261 = vpop.xlane.xlu0 %260
      %v262 = vsel %vm47, %v258, 0.0
      %263 = vadd.xlane.f32.xlu0 %v262
      %v264 = vpop.xlane.xlu0 %263
      %v265 = vmul.f32 %v261, %v252
      %v266 = vmul.f32 %v264, %v252
      %v267 = vadd.f32 %v265, 1e-05
      %v268 = vadd.f32 %v266, 1e-05
      %v269 = vrsqrt.pop %v267
      %v270 = vrsqrt.pop %v268
      %v271 = vmul.f32 %v255, %v269
      %v272 = vmul.f32 %v256, %v270
      %v273 = vld [vmem:[%s5] sm:$0x1]
      %v275 = vlaneseq
      %v276 = vshrl.u32 %v275, 7
      %v277 = vsub.s32 0, %v276
      %v278 = vrot.slane %v273, %v277
      %v280 = vmul.f32 %v271, %v278
      %v281 = vmul.f32 %v272, %v278
      %v282 = vld [vmem:[%s6] sm:$0x1]
      %v284 = vlaneseq
      %v285 = vshrl.u32 %v284, 7
      %v286 = vsub.s32 0, %v285
      %v287 = vrot.slane %v282, %v286
      %v289 = vadd.f32 %v280, %v287
      %v290 = vadd.f32 %v281, %v287
      %291 = vst.msk [vmem:[#allocation3] sm:$0xff] %vm47, %v289
      %292 = vst.msk [vmem:[#allocation3 + $0x8] sm:$0xff] %vm47, %v290
    $region37: #{transformer_block.7} parent=1 // pred_fallthru
      _
    // Predicated region
    $region38: #{transformer_block.7} parent=1 // pred_check
      _
    $region39: #{transformer_block.7} parent=1 // pred_check_branch
      %294 = sbr.rel (0) target = $region41
    $region40: #{transformer_block.7} parent=1 // pred_region
      %s296 = ssub.s32 256, 256
      %297 = vsyncadd [#allocation4], %s296
      %s298 = sshll.u32 [#allocation3], 4
      %s299 = int_to_ptr.vmem [resolvable:$true] %s298
      %304 = dma.vmem_to_hbm [thread:$0]  %s299, 256, %s7, [#allocation4], 128, 128, 8
    $region41: #{transformer_block.7} parent=1 // pred_fallthru
      _
    // Predicated region
    $region42: #{transformer_block.7} parent=1 // pred_check
      _
    $region43: #{transformer_block.7} parent=1 // pred_check_branch
      %306 = sbr.rel (0) target = $region45
    $region44: #{transformer_block.7} parent=1 // pred_region
      %307 = dma.done [#allocation4], 256
    $region45: #{transformer_block.7} parent=1 // pred_fallthru
      _
    %308 = vsyncpa [#allocation4], 1

// kernel: transformer_block.5
$region0: #{transformer_block.5}
  #allocation0 [shape = 'u32[]', space=smem, size = 0x4, offset = 0x4, fixed_abs, tag = 'smem constant byte address 0x4 - core index']
  #allocation1 [shape = 'u32[144,128]{1,0:T(1,128)}', space=vmem, size = 0x12000, scoped, tag = 'internal scratch']
  %s0 = inlined_call_operand.vmem [shape: f32[16,3,4,8], index: 0, kind: input, shape index: {}, may-alias: {0,1,2}]
  %s1 = inlined_call_operand.vmem [shape: f32[16,3,4,8], index: 1, kind: input, shape index: {}, may-alias: {0,1,2}]
  %s2 = inlined_call_operand.vmem [shape: f32[16,3,4,8], index: 2, kind: input, shape index: {}, may-alias: {0,1,2}]
  %s3 = inlined_call_operand.vmem [shape: f32[2,8,32], index: 3, kind: output, shape index: {}]
  %s4 = sld [smem:[#allocation0]]
  $region168: #{transformer_block.5} parent=0
    _
  %s6 = ssub.s32 1, %s4
  %s7 = scalar_select 0, %s6, %s4
  $region1: #{transformer_block.5} parent=0
    #allocation2 [shape = 'u8[32768]{0}', space=vmem, size = 0x8000, scoped, tag = 'input window, operand 0']
    #allocation3 [shape = 'u8[32768]{0}', space=vmem, size = 0x8000, scoped, tag = 'input window, operand 1']
    #allocation4 [shape = 'u8[32768]{0}', space=vmem, size = 0x8000, scoped, tag = 'input window, operand 2']
    loop: start=0, step=1, limit=4
    $region2: #{transformer_block.5} parent=1 // loop_pre_header
      _
    $region3: #{transformer_block.5} parent=1 // loop_header
      %s9 = sphi 0, %s13
      %p10 = scmp.ge.s32.totalorder %s9, 4
      %s19 = sphi 0, %s21
      %s22 = sphi 0, %s19
      %s23 = sphi 0, %s22
      %s39 = sphi 0, %s23
      %s45 = sphi 0, %s47
      %s48 = sphi 0, %s45
      %s49 = sphi 0, %s48
      %s65 = sphi 0, %s49
      %s71 = sphi 0, %s73
      %s74 = sphi 0, %s71
      %s75 = sphi 0, %s74
      %s91 = sphi 0, %s75
      %s97 = sphi 0, %s99
      %s100 = sphi 0, %s97
      %s101 = sphi 0, %s100
      %s117 = sphi 0, %s101
    $region4: #{transformer_block.5} parent=1 // loop_header_branch
      %12 = sbr.rel (%p10) target = $region8
    $region5: #{transformer_block.5} parent=1 // loop_body
      %s14 = ssub.s32 %s9, 1
      %s15 = ssub.s32 %s9, 2
      %s16 = sadd.s32 %s9, 1
      %s17 = ssub.s32 %s9, %s16
      %p18 = scmp.eq.s32.totalorder %s17, 0
      %s20 = sadd.s32 %s19, 1
      %s21 = scalar_select %p18, %s19, %s20
      %p24 = pneg %p18
      %p25 = scmp.eq.s32.totalorder %s9, 1
      %p26 = por %p24, %p25
      %p27 = scmp.ne.s32.totalorder %s19, %s22
      %p28 = scmp.eq.s32.totalorder %s9, 0
      %p29 = por %p27, %p28
      %p30 = scmp.ne.s32.totalorder %s19, %s22
      %p31 = scmp.eq.s32.totalorder %s14, 1
      %p32 = por %p30, %p31
      %p33 = scmp.ne.s32.totalorder %s22, %s23
      %p34 = scmp.eq.s32.totalorder %s14, 0
      %p35 = por %p33, %p34
      %p36 = scmp.ne.s32.totalorder %s22, %s23
      %p37 = scmp.eq.s32.totalorder %s15, 1
      %p38 = por %p36, %p37
      %p40 = scmp.ne.s32.totalorder %s23, %s39
      %p41 = scmp.eq.s32.totalorder %s15, 0
      %p42 = por %p40, %p41
      %s43 = ssub.s32 %s9, %s16
      %p44 = scmp.eq.s32.totalorder %s43, 0
      %s46 = sadd.s32 %s45, 1
      %s47 = scalar_select %p44, %s45, %s46
      %p50 = pneg %p44
      %p51 = scmp.eq.s32.totalorder %s9, 1
      %p52 = por %p50, %p51
      %p53 = scmp.ne.s32.totalorder %s45, %s48
      %p54 = scmp.eq.s32.totalorder %s9, 0
      %p55 = por %p53, %p54
      %p56 = scmp.ne.s32.totalorder %s45, %s48
      %p57 = scmp.eq.s32.totalorder %s14, 1
      %p58 = por %p56, %p57
      %p59 = scmp.ne.s32.totalorder %s48, %s49
      %p60 = scmp.eq.s32.totalorder %s14, 0
      %p61 = por %p59, %p60
      %p62 = scmp.ne.s32.totalorder %s48, %s49
      %p63 = scmp.eq.s32.totalorder %s15, 1
      %p64 = por %p62, %p63
      %p66 = scmp.ne.s32.totalorder %s49, %s65
      %p67 = scmp.eq.s32.totalorder %s15, 0
      %p68 = por %p66, %p67
      %s69 = ssub.s32 %s9, %s16
      %p70 = scmp.eq.s32.totalorder %s69, 0
      %s72 = sadd.s32 %s71, 1
      %s73 = scalar_select %p70, %s71, %s72
      %p76 = pneg %p70
      %p77 = scmp.eq.s32.totalorder %s9, 1
      %p78 = por %p76, %p77
      %p79 = scmp.ne.s32.totalorder %s71, %s74
      %p80 = scmp.eq.s32.totalorder %s9, 0
      %p81 = por %p79, %p80
      %p82 = scmp.ne.s32.totalorder %s71, %s74
      %p83 = scmp.eq.s32.totalorder %s14, 1
      %p84 = por %p82, %p83
      %p85 = scmp.ne.s32.totalorder %s74, %s75
      %p86 = scmp.eq.s32.totalorder %s14, 0
      %p87 = por %p85, %p86
      %p88 = scmp.ne.s32.totalorder %s74, %s75
      %p89 = scmp.eq.s32.totalorder %s15, 1
      %p90 = por %p88, %p89
      %p92 = scmp.ne.s32.totalorder %s75, %s91
      %p93 = scmp.eq.s32.totalorder %s15, 0
      %p94 = por %p92, %p93
      %s95 = ssub.s32 %s9, %s16
      %p96 = scmp.eq.s32.totalorder %s95, 0
      %s98 = sadd.s32 %s97, 1
      %s99 = scalar_select %p96, %s97, %s98
      %p102 = pneg %p96
      %p103 = scmp.eq.s32.totalorder %s9, 1
      %p104 = por %p102, %p103
      %p105 = scmp.ne.s32.totalorder %s97, %s100
      %p106 = scmp.eq.s32.totalorder %s9, 0
      %p107 = por %p105, %p106
      %p108 = scmp.ne.s32.totalorder %s97, %s100
      %p109 = scmp.eq.s32.totalorder %s14, 1
      %p110 = por %p108, %p109
      %p111 = scmp.ne.s32.totalorder %s100, %s101
      %p112 = scmp.eq.s32.totalorder %s14, 0
      %p113 = por %p111, %p112
      %p114 = scmp.ne.s32.totalorder %s100, %s101
      %p115 = scmp.eq.s32.totalorder %s15, 1
      %p116 = por %p114, %p115
      %p118 = scmp.ne.s32.totalorder %s101, %s117
      %p119 = scmp.eq.s32.totalorder %s15, 0
      %p120 = por %p118, %p119
      %p121 = scmp.le.s32.totalorder 1, %s9
      %p122 = scmp.lt.s32.totalorder %s9, 3
      %p123 = pnand %p121, %p122
      %p124 = pneg %p123
      // Predicated region
      $region9: #{transformer_block.5} parent=5 // pred_check
        _
      $region10: #{transformer_block.5} parent=5 // pred_check_branch
        %126 = sbr.rel (%p123) target = $region12
      $region11: #{transformer_block.5} parent=5 // pred_region
        %s127 = ssub.s32 %s9, 1
      $region12: #{transformer_block.5} parent=5 // pred_fallthru
        _
      %p128 = scmp.lt.s32.totalorder %s9, 2
      // Predicated region
      $region13: #{transformer_block.5} parent=5 // pred_check
        %p129 = pneg %p128
      $region14: #{transformer_block.5} parent=5 // pred_check_branch
        %131 = sbr.rel (%p129) target = $region16
      $region15: #{transformer_block.5} parent=5 // pred_region
        // Predicated region
        $region17: #{transformer_block.5} parent=15 // pred_check
          %p132 = pneg %p29
        $region18: #{transformer_block.5} parent=15 // pred_check_branch
          %134 = sbr.rel (%p132) target = $region20
        $region19: #{transformer_block.5} parent=15 // pred_region
          %s135 = sand.u32 %s19, 1
          %s136 = sand.u32 %s19, 1
          %s137 = smul.addr %s136, 32
          %s138 = scalar_lea.vmem [#allocation2], %s137
          %s139 = smul.u32 8, %s9
          %s140 = smul.addr %s139, 3
          %s141 = smul.addr %s140, 4
          %s142 = scalar_lea.vmem %s0, %s141
          // Predicated region
          $region21: #{transformer_block.5} parent=19 // pred_check
            _
          $region22: #{transformer_block.5} parent=19 // pred_check_branch
            %144 = sbr.rel (0) target = $region24
          $region23: #{transformer_block.5} parent=19 // pred_region
            // Predicated region
            $region25: #{transformer_block.5} parent=23 // pred_check
              _
            $region26: #{transformer_block.5} parent=23 // pred_check_branch
              %146 = sbr.rel target = $region28
            $region27: #{transformer_block.5} parent=23 // pred_region
              // Predicated region
              $region40: #{transformer_block.5} parent=27 // pred_check
                _
              $region41: #{transformer_block.5} parent=27 // pred_check_branch
                %176 = sbr.rel (0) target = $region43
              $region42: #{transformer_block.5} parent=27 // pred_region
                loop: start=0, step=1, limit=1
                $region44: #{transformer_block.5} parent=42 // loop_pre_header
                  _
                $region45: #{transformer_block.5} parent=42 // loop_header
                  %s178 = sphi 0, %s182
                  %p179 = scmp.ge.s32.totalorder %s178, 1
                  %s183 = sphi %s142, %s142
                  %s184 = sphi %s138, %s138
                $region46: #{transformer_block.5} parent=42 // loop_header_branch
                  %181 = sbr.rel (%p179) target = $region50
                $region47: #{transformer_block.5} parent=42 // loop_body
                  _
                $region48: #{transformer_block.5} parent=42 // loop_footer
                  %s182 = sadd.s32 1, %s178
                $region49: #{transformer_block.5} parent=42 // loop_footer_branch
                  %177 = sbr.rel target = $region45
                $region50: #{transformer_block.5} parent=42 // loop_exit
                  _
                %s186 = ssub.s32 16, 1
                loop: start=0, step=1, limit=1
                $region51: #{transformer_block.5} parent=42 // loop_pre_header
                  _
                $region52: #{transformer_block.5} parent=42 // loop_header
                  %s188 = sphi 0, %s192
                  %p189 = scmp.ge.s32.totalorder %s188, 1
                  %s193 = sphi %s142, %s142
                  %s194 = sphi %s138, %s138
                $region53: #{transformer_block.5} parent=42 // loop_header_branch
                  %191 = sbr.rel (%p189) target = $region57
                $region54: #{transformer_block.5} parent=42 // loop_body
                  %v195 = vld [vmem:[%s193] sm:%s186]
                  %196 = vst [vmem:[%s194] sm:%s186] %v195
                  %v197 = vld [vmem:[%s193 + $0xc] sm:%s186]
                  %198 = vst [vmem:[%s194 + $0x4] sm:%s186] %v197
                  %v199 = vld [vmem:[%s193 + $0x18] sm:%s186]
                  %200 = vst [vmem:[%s194 + $0x8] sm:%s186] %v199
                  %v201 = vld [vmem:[%s193 + $0x24] sm:%s186]
                  %202 = vst [vmem:[%s194 + $0xc] sm:%s186] %v201
                  %v203 = vld [vmem:[%s193 + $0x30] sm:%s186]
                  %204 = vst [vmem:[%s194 + $0x10] sm:%s186] %v203
                  %v205 = vld [vmem:[%s193 + $0x3c] sm:%s186]
                  %206 = vst [vmem:[%s194 + $0x14] sm:%s186] %v205
                  %v207 = vld [vmem:[%s193 + $0x48] sm:%s186]
                  %208 = vst [vmem:[%s194 + $0x18] sm:%s186] %v207
                  %v209 = vld [vmem:[%s193 + $0x54] sm:%s186]
                  %210 = vst [vmem:[%s194 + $0x1c] sm:%s186] %v209
                $region55: #{transformer_block.5} parent=42 // loop_footer
                  %s192 = sadd.s32 1, %s188
                $region56: #{transformer_block.5} parent=42 // loop_footer_branch
                  %187 = sbr.rel target = $region52
                $region57: #{transformer_block.5} parent=42 // loop_exit
                  _
              $region43: #{transformer_block.5} parent=27 // pred_fallthru
                _
            $region28: #{transformer_block.5} parent=23 // pred_fallthru
              _
            // Predicated region
            $region29: #{transformer_block.5} parent=23 // pred_check
              _
            $region30: #{transformer_block.5} parent=23 // pred_check_branch
              %148 = sbr.rel (0) target = $region32
            $region31: #{transformer_block.5} parent=23 // pred_region
              %s150 = ssub.s32 16, 1
              loop: start=0, step=1, limit=1
              $region33: #{transformer_block.5} parent=31 // loop_pre_header
                _
              $region34: #{transformer_block.5} parent=31 // loop_header
                %s152 = sphi 0, %s156
                %p153 = scmp.ge.s32.totalorder %s152, 1
                %s157 = sphi %s142, %s142
                %s158 = sphi %s138, %s138
              $region35: #{transformer_block.5} parent=31 // loop_header_branch
                %155 = sbr.rel (%p153) target = $region39
              $region36: #{transformer_block.5} parent=31 // loop_body
                %v159 = vld [vmem:[%s157] sm:%s150]
                %160 = vst [vmem:[%s158] sm:%s150] %v159
                %v161 = vld [vmem:[%s157 + $0xc] sm:%s150]
                %162 = vst [vmem:[%s158 + $0x4] sm:%s150] %v161
                %v163 = vld [vmem:[%s157 + $0x18] sm:%s150]
                %164 = vst [vmem:[%s158 + $0x8] sm:%s150] %v163
                %v165 = vld [vmem:[%s157 + $0x24] sm:%s150]
                %166 = vst [vmem:[%s158 + $0xc] sm:%s150] %v165
                %v167 = vld [vmem:[%s157 + $0x30] sm:%s150]
                %168 = vst [vmem:[%s158 + $0x10] sm:%s150] %v167
                %v169 = vld [vmem:[%s157 + $0x3c] sm:%s150]
                %170 = vst [vmem:[%s158 + $0x14] sm:%s150] %v169
                %v171 = vld [vmem:[%s157 + $0x48] sm:%s150]
                %172 = vst [vmem:[%s158 + $0x18] sm:%s150] %v171
                %v173 = vld [vmem:[%s157 + $0x54] sm:%s150]
                %174 = vst [vmem:[%s158 + $0x1c] sm:%s150] %v173
              $region37: #{transformer_block.5} parent=31 // loop_footer
                %s156 = sadd.s32 1, %s152
              $region38: #{transformer_block.5} parent=31 // loop_footer_branch
                %151 = sbr.rel target = $region34
              $region39: #{transformer_block.5} parent=31 // loop_exit
                _
            $region32: #{transformer_block.5} parent=23 // pred_fallthru
              _
          $region24: #{transformer_block.5} parent=19 // pred_fallthru
            _
          %211 = vnop
        $region20: #{transformer_block.5} parent=15 // pred_fallthru
          _
        // Predicated region
        $region58: #{transformer_block.5} parent=15 // pred_check
          %p212 = pneg %p55
        $region59: #{transformer_block.5} parent=15 // pred_check_branch
          %214 = sbr.rel (%p212) target = $region61
        $region60: #{transformer_block.5} parent=15 // pred_region
          %s215 = sand.u32 %s45, 1
          %s216 = sand.u32 %s45, 1
          %s217 = smul.addr %s216, 32
          %s218 = scalar_lea.vmem [#allocation3], %s217
          %s219 = smul.u32 8, %s9
          %s220 = smul.addr %s219, 3
          %s221 = sadd.s32 1, %s220
          %s222 = smul.addr %s221, 4
          %s223 = scalar_lea.vmem %s1, %s222
          // Predicated region
          $region62: #{transformer_block.5} parent=60 // pred_check
            _
          $region63: #{transformer_block.5} parent=60 // pred_check_branch
            %225 = sbr.rel (0) target = $region65
          $region64: #{transformer_block.5} parent=60 // pred_region
            // Predicated region
            $region66: #{transformer_block.5} parent=64 // pred_check
              _
            $region67: #{transformer_block.5} parent=64 // pred_check_branch
              %227 = sbr.rel target = $region69
            $region68: #{transformer_block.5} parent=64 // pred_region
              // Predicated region
              $region81: #{transformer_block.5} parent=68 // pred_check
                _
              $region82: #{transformer_block.5} parent=68 // pred_check_branch
                %257 = sbr.rel (0) target = $region84
              $region83: #{transformer_block.5} parent=68 // pred_region
                loop: start=0, step=1, limit=1
                $region85: #{transformer_block.5} parent=83 // loop_pre_header
                  _
                $region86: #{transformer_block.5} parent=83 // loop_header
                  %s259 = sphi 0, %s263
                  %p260 = scmp.ge.s32.totalorder %s259, 1
                  %s264 = sphi %s223, %s223
                  %s265 = sphi %s218, %s218
                $region87: #{transformer_block.5} parent=83 // loop_header_branch
                  %262 = sbr.rel (%p260) target = $region91
                $region88: #{transformer_block.5} parent=83 // loop_body
                  _
                $region89: #{transformer_block.5} parent=83 // loop_footer
                  %s263 = sadd.s32 1, %s259
                $region90: #{transformer_block.5} parent=83 // loop_footer_branch
                  %258 = sbr.rel target = $region86
                $region91: #{transformer_block.5} parent=83 // loop_exit
                  _
                %s267 = ssub.s32 16, 1
                loop: start=0, step=1, limit=1
                $region92: #{transformer_block.5} parent=83 // loop_pre_header
                  _
                $region93: #{transformer_block.5} parent=83 // loop_header
                  %s269 = sphi 0, %s273
                  %p270 = scmp.ge.s32.totalorder %s269, 1
                  %s274 = sphi %s223, %s223
                  %s275 = sphi %s218, %s218
                $region94: #{transformer_block.5} parent=83 // loop_header_branch
                  %272 = sbr.rel (%p270) target = $region98
                $region95: #{transformer_block.5} parent=83 // loop_body
                  %v276 = vld [vmem:[%s274] sm:%s267]
                  %277 = vst [vmem:[%s275] sm:%s267] %v276
                  %v278 = vld [vmem:[%s274 + $0xc] sm:%s267]
                  %279 = vst [vmem:[%s275 + $0x4] sm:%s267] %v278
                  %v280 = vld [vmem:[%s274 + $0x18] sm:%s267]
                  %281 = vst [vmem:[%s275 + $0x8] sm:%s267] %v280
                  %v282 = vld [vmem:[%s274 + $0x24] sm:%s267]
                  %283 = vst [vmem:[%s275 + $0xc] sm:%s267] %v282
                  %v284 = vld [vmem:[%s274 + $0x30] sm:%s267]
                  %285 = vst [vmem:[%s275 + $0x10] sm:%s267] %v284
                  %v286 = vld [vmem:[%s274 + $0x3c] sm:%s267]
                  %287 = vst [vmem:[%s275 + $0x14] sm:%s267] %v286
                  %v288 = vld [vmem:[%s274 + $0x48] sm:%s267]
                  %289 = vst [vmem:[%s275 + $0x18] sm:%s267] %v288
                  %v290 = vld [vmem:[%s274 + $0x54] sm:%s267]
                  %291 = vst [vmem:[%s275 + $0x1c] sm:%s267] %v290
                $region96: #{transformer_block.5} parent=83 // loop_footer
                  %s273 = sadd.s32 1, %s269
                $region97: #{transformer_block.5} parent=83 // loop_footer_branch
                  %268 = sbr.rel target = $region93
                $region98: #{transformer_block.5} parent=83 // loop_exit
                  _
              $region84: #{transformer_block.5} parent=68 // pred_fallthru
                _
            $region69: #{transformer_block.5} parent=64 // pred_fallthru
              _
            // Predicated region
            $region70: #{transformer_block.5} parent=64 // pred_check
              _
            $region71: #{transformer_block.5} parent=64 // pred_check_branch
              %229 = sbr.rel (0) target = $region73
            $region72: #{transformer_block.5} parent=64 // pred_region
              %s231 = ssub.s32 16, 1
              loop: start=0, step=1, limit=1
              $region74: #{transformer_block.5} parent=72 // loop_pre_header
                _
              $region75: #{transformer_block.5} parent=72 // loop_header
                %s233 = sphi 0, %s237
                %p234 = scmp.ge.s32.totalorder %s233, 1
                %s238 = sphi %s223, %s223
                %s239 = sphi %s218, %s218
              $region76: #{transformer_block.5} parent=72 // loop_header_branch
                %236 = sbr.rel (%p234) target = $region80
              $region77: #{transformer_block.5} parent=72 // loop_body
                %v240 = vld [vmem:[%s238] sm:%s231]
                %241 = vst [vmem:[%s239] sm:%s231] %v240
                %v242 = vld [vmem:[%s238 + $0xc] sm:%s231]
                %243 = vst [vmem:[%s239 + $0x4] sm:%s231] %v242
                %v244 = vld [vmem:[%s238 + $0x18] sm:%s231]
                %245 = vst [vmem:[%s239 + $0x8] sm:%s231] %v244
                %v246 = vld [vmem:[%s238 + $0x24] sm:%s231]
                %247 = vst [vmem:[%s239 + $0xc] sm:%s231] %v246
                %v248 = vld [vmem:[%s238 + $0x30] sm:%s231]
                %249 = vst [vmem:[%s239 + $0x10] sm:%s231] %v248
                %v250 = vld [vmem:[%s238 + $0x3c] sm:%s231]
                %251 = vst [vmem:[%s239 + $0x14] sm:%s231] %v250
                %v252 = vld [vmem:[%s238 + $0x48] sm:%s231]
                %253 = vst [vmem:[%s239 + $0x18] sm:%s231] %v252
                %v254 = vld [vmem:[%s238 + $0x54] sm:%s231]
                %255 = vst [vmem:[%s239 + $0x1c] sm:%s231] %v254
              $region78: #{transformer_block.5} parent=72 // loop_footer
                %s237 = sadd.s32 1, %s233
              $region79: #{transformer_block.5} parent=72 // loop_footer_branch
                %232 = sbr.rel target = $region75
              $region80: #{transformer_block.5} parent=72 // loop_exit
                _
            $region73: #{transformer_block.5} parent=64 // pred_fallthru
              _
          $region65: #{transformer_block.5} parent=60 // pred_fallthru
            _
          %292 = vnop
        $region61: #{transformer_block.5} parent=15 // pred_fallthru
          _
        // Predicated region
        $region99: #{transformer_block.5} parent=15 // pred_check
          %p293 = pneg %p81
        $region100: #{transformer_block.5} parent=15 // pred_check_branch
          %295 = sbr.rel (%p293) target = $region102
        $region101: #{transformer_block.5} parent=15 // pred_region
          %s296 = sand.u32 %s71, 1
          %s297 = sand.u32 %s71, 1
          %s298 = smul.addr %s297, 32
          %s299 = scalar_lea.vmem [#allocation4], %s298
          %s300 = smul.u32 8, %s9
          %s301 = smul.addr %s300, 3
          %s302 = sadd.s32 2, %s301
          %s303 = smul.addr %s302, 4
          %s304 = scalar_lea.vmem %s2, %s303
          // Predicated region
          $region103: #{transformer_block.5} parent=101 // pred_check
            _
          $region104: #{transformer_block.5} parent=101 // pred_check_branch
            %306 = sbr.rel (0) target = $region106
          $region105: #{transformer_block.5} parent=101 // pred_region
            // Predicated region
            $region107: #{transformer_block.5} parent=105 // pred_check
              _
            $region108: #{transformer_block.5} parent=105 // pred_check_branch
              %308 = sbr.rel target = $region110
            $region109: #{transformer_block.5} parent=105 // pred_region
              // Predicated region
              $region122: #{transformer_block.5} parent=109 // pred_check
                _
              $region123: #{transformer_block.5} parent=109 // pred_check_branch
                %338 = sbr.rel (0) target = $region125
              $region124: #{transformer_block.5} parent=109 // pred_region
                loop: start=0, step=1, limit=1
                $region126: #{transformer_block.5} parent=124 // loop_pre_header
                  _
                $region127: #{transformer_block.5} parent=124 // loop_header
                  %s340 = sphi 0, %s344
                  %p341 = scmp.ge.s32.totalorder %s340, 1
                  %s345 = sphi %s304, %s304
                  %s346 = sphi %s299, %s299
                $region128: #{transformer_block.5} parent=124 // loop_header_branch
                  %343 = sbr.rel (%p341) target = $region132
                $region129: #{transformer_block.5} parent=124 // loop_body
                  _
                $region130: #{transformer_block.5} parent=124 // loop_footer
                  %s344 = sadd.s32 1, %s340
                $region131: #{transformer_block.5} parent=124 // loop_footer_branch
                  %339 = sbr.rel target = $region127
                $region132: #{transformer_block.5} parent=124 // loop_exit
                  _
                %s348 = ssub.s32 16, 1
                loop: start=0, step=1, limit=1
                $region133: #{transformer_block.5} parent=124 // loop_pre_header
                  _
                $region134: #{transformer_block.5} parent=124 // loop_header
                  %s350 = sphi 0, %s354
                  %p351 = scmp.ge.s32.totalorder %s350, 1
                  %s355 = sphi %s304, %s304
                  %s356 = sphi %s299, %s299
                $region135: #{transformer_block.5} parent=124 // loop_header_branch
                  %353 = sbr.rel (%p351) target = $region139
                $region136: #{transformer_block.5} parent=124 // loop_body
                  %v357 = vld [vmem:[%s355] sm:%s348]
                  %358 = vst [vmem:[%s356] sm:%s348] %v357
                  %v359 = vld [vmem:[%s355 + $0xc] sm:%s348]
                  %360 = vst [vmem:[%s356 + $0x4] sm:%s348] %v359
                  %v361 = vld [vmem:[%s355 + $0x18] sm:%s348]
                  %362 = vst [vmem:[%s356 + $0x8] sm:%s348] %v361
                  %v363 = vld [vmem:[%s355 + $0x24] sm:%s348]
                  %364 = vst [vmem:[%s356 + $0xc] sm:%s348] %v363
                  %v365 = vld [vmem:[%s355 + $0x30] sm:%s348]
                  %366 = vst [vmem:[%s356 + $0x10] sm:%s348] %v365
                  %v367 = vld [vmem:[%s355 + $0x3c] sm:%s348]
                  %368 = vst [vmem:[%s356 + $0x14] sm:%s348] %v367
                  %v369 = vld [vmem:[%s355 + $0x48] sm:%s348]
                  %370 = vst [vmem:[%s356 + $0x18] sm:%s348] %v369
                  %v371 = vld [vmem:[%s355 + $0x54] sm:%s348]
                  %372 = vst [vmem:[%s356 + $0x1c] sm:%s348] %v371
                $region137: #{transformer_block.5} parent=124 // loop_footer
                  %s354 = sadd.s32 1, %s350
                $region138: #{transformer_block.5} parent=124 // loop_footer_branch
                  %349 = sbr.rel target = $region134
                $region139: #{transformer_block.5} parent=124 // loop_exit
                  _
              $region125: #{transformer_block.5} parent=109 // pred_fallthru
                _
            $region110: #{transformer_block.5} parent=105 // pred_fallthru
              _
            // Predicated region
            $region111: #{transformer_block.5} parent=105 // pred_check
              _
            $region112: #{transformer_block.5} parent=105 // pred_check_branch
              %310 = sbr.rel (0) target = $region114
            $region113: #{transformer_block.5} parent=105 // pred_region
              %s312 = ssub.s32 16, 1
              loop: start=0, step=1, limit=1
              $region115: #{transformer_block.5} parent=113 // loop_pre_header
                _
              $region116: #{transformer_block.5} parent=113 // loop_header
                %s314 = sphi 0, %s318
                %p315 = scmp.ge.s32.totalorder %s314, 1
                %s319 = sphi %s304, %s304
                %s320 = sphi %s299, %s299
              $region117: #{transformer_block.5} parent=113 // loop_header_branch
                %317 = sbr.rel (%p315) target = $region121
              $region118: #{transformer_block.5} parent=113 // loop_body
                %v321 = vld [vmem:[%s319] sm:%s312]
                %322 = vst [vmem:[%s320] sm:%s312] %v321
                %v323 = vld [vmem:[%s319 + $0xc] sm:%s312]
                %324 = vst [vmem:[%s320 + $0x4] sm:%s312] %v323
                %v325 = vld [vmem:[%s319 + $0x18] sm:%s312]
                %326 = vst [vmem:[%s320 + $0x8] sm:%s312] %v325
                %v327 = vld [vmem:[%s319 + $0x24] sm:%s312]
                %328 = vst [vmem:[%s320 + $0xc] sm:%s312] %v327
                %v329 = vld [vmem:[%s319 + $0x30] sm:%s312]
                %330 = vst [vmem:[%s320 + $0x10] sm:%s312] %v329
                %v331 = vld [vmem:[%s319 + $0x3c] sm:%s312]
                %332 = vst [vmem:[%s320 + $0x14] sm:%s312] %v331
                %v333 = vld [vmem:[%s319 + $0x48] sm:%s312]
                %334 = vst [vmem:[%s320 + $0x18] sm:%s312] %v333
                %v335 = vld [vmem:[%s319 + $0x54] sm:%s312]
                %336 = vst [vmem:[%s320 + $0x1c] sm:%s312] %v335
              $region119: #{transformer_block.5} parent=113 // loop_footer
                %s318 = sadd.s32 1, %s314
              $region120: #{transformer_block.5} parent=113 // loop_footer_branch
                %313 = sbr.rel target = $region116
              $region121: #{transformer_block.5} parent=113 // loop_exit
                _
            $region114: #{transformer_block.5} parent=105 // pred_fallthru
              _
          $region106: #{transformer_block.5} parent=101 // pred_fallthru
            _
          %373 = vnop
        $region102: #{transformer_block.5} parent=15 // pred_fallthru
          _
      $region16: #{transformer_block.5} parent=5 // pred_fallthru
        _
      %p374 = scmp.le.s32.totalorder 1, %s9
      %p375 = scmp.lt.s32.totalorder %s9, 3
      %p376 = pnand %p374, %p375
      %p377 = pneg %p376
      // Predicated region
      $region140: #{transformer_block.5} parent=5 // pred_check
        _
      $region141: #{transformer_block.5} parent=5 // pred_check_branch
        %379 = sbr.rel (%p376) target = $region143
      $region142: #{transformer_block.5} parent=5 // pred_region
        %s380 = ssub.s32 %s9, 1
        %s381 = sand.u32 %s22, 1
        %s382 = sand.u32 %s22, 1
        %s383 = smul.addr %s382, 32
        %s384 = scalar_lea.vmem [#allocation2], %s383
        // Predicated region
        $region144: #{transformer_block.5} parent=142 // pred_check
          %p385 = pneg %p35
        $region145: #{transformer_block.5} parent=142 // pred_check_branch
          %387 = sbr.rel (%p385) target = $region147
        $region146: #{transformer_block.5} parent=142 // pred_region
          _
        $region147: #{transformer_block.5} parent=142 // pred_fallthru
          _
        %s388 = sand.u32 %s48, 1
        %s389 = sand.u32 %s48, 1
        %s390 = smul.addr %s389, 32
        %s391 = scalar_lea.vmem [#allocation3], %s390
        // Predicated region
        $region148: #{transformer_block.5} parent=142 // pred_check
          %p392 = pneg %p61
        $region149: #{transformer_block.5} parent=142 // pred_check_branch
          %394 = sbr.rel (%p392) target = $region151
        $region150: #{transformer_block.5} parent=142 // pred_region
          _
        $region151: #{transformer_block.5} parent=142 // pred_fallthru
          _
        %s395 = sand.u32 %s74, 1
        %s396 = sand.u32 %s74, 1
        %s397 = smul.addr %s396, 32
        %s398 = scalar_lea.vmem [#allocation4], %s397
        // Predicated region
        $region152: #{transformer_block.5} parent=142 // pred_check
          %p399 = pneg %p87
        $region153: #{transformer_block.5} parent=142 // pred_check_branch
          %401 = sbr.rel (%p399) target = $region155
        $region154: #{transformer_block.5} parent=142 // pred_region
          _
        $region155: #{transformer_block.5} parent=142 // pred_fallthru
          _
        %s402 = sand.u32 %s22, 1
        %s403 = sand.u32 %s22, 1
        %s404 = smul.addr %s403, 32
        %s405 = scalar_lea.vmem [#allocation2], %s404
        %p406 = pneg %p35
        %p407 = pneg %p32
        %s408 = sand.u32 %s48, 1
        %s409 = sand.u32 %s48, 1
        %s410 = smul.addr %s409, 32
        %s411 = scalar_lea.vmem [#allocation3], %s410
        %p412 = pneg %p61
        %p413 = pneg %p58
        %s414 = sand.u32 %s74, 1
        %s415 = sand.u32 %s74, 1
        %s416 = smul.addr %s415, 32
        %s417 = scalar_lea.vmem [#allocation4], %s416
        %p418 = pneg %p87
        %p419 = pneg %p84
        %p420 = pneg %p113
        %p421 = pneg %p110
        %p422 = scmp.lt.s32.totalorder %s14, 1
        %s423 = scalar_select %p422, %s14, 1
        %s424 = smul.addr %s423, 8
        %s425 = scalar_lea.vmem %s3, %s424
        %s426 = smul.u32 8, %s14
        %s427 = smul.u32 8, %s14
        %s428 = smul.u32 8, %s14
        %p429 = scmp.lt.s32.totalorder %s14, 1
        %s430 = scalar_select %p429, %s14, 1
        %s431 = smul.addr %s430, 8
        %s432 = scalar_lea.vmem %s3, %s431
        %v433 = vlaneseq
        %v434 = vshrl.u32 %v433, 7
        %v435 = vlaneseq
        %v436 = vand.u32 %v435, 127
        %vm437 = vcmp.le.s32.totalorder %v436, %v434
        %v438 = vld [vmem:[%s384] sm:$0xf]
        %v439 = vld [vmem:[%s384 + $0x4] sm:$0xf]
        %v440 = vld [vmem:[%s384 + $0x8] sm:$0xf]
        %v441 = vld [vmem:[%s384 + $0xc] sm:$0xf]
        %v442 = vld [vmem:[%s384 + $0x10] sm:$0xf]
        %v443 = vld [vmem:[%s384 + $0x14] sm:$0xf]
        %v444 = vld [vmem:[%s384 + $0x18] sm:$0xf]
        %v445 = vld [vmem:[%s384 + $0x1c] sm:$0xf]
        %v446 = vmul.f32 %v438, 0.35355338
        %v447 = vmul.f32 %v439, 0.35355338
        %v448 = vmul.f32 %v440, 0.35355338
        %v449 = vmul.f32 %v441, 0.35355338
        %v450 = vmul.f32 %v442, 0.35355338
        %v451 = vmul.f32 %v443, 0.35355338
        %v452 = vmul.f32 %v444, 0.35355338
        %v453 = vmul.f32 %v445, 0.35355338
        %v454 = vld [vmem:[%s391] sm:$0xf]
        %v455 = vld [vmem:[%s391 + $0x4] sm:$0xf]
        %v456 = vld [vmem:[%s391 + $0x8] sm:$0xf]
        %v457 = vld [vmem:[%s391 + $0xc] sm:$0xf]
        %v458 = vld [vmem:[%s391 + $0x10] sm:$0xf]
        %v459 = vld [vmem:[%s391 + $0x14] sm:$0xf]
        %v460 = vld [vmem:[%s391 + $0x18] sm:$0xf]
        %v461 = vld [vmem:[%s391 + $0x1c] sm:$0xf]
        %v462 = vld [vmem:[%s398] sm:$0xf]
        %v463 = vld [vmem:[%s398 + $0x4] sm:$0xf]
        %v464 = vld [vmem:[%s398 + $0x8] sm:$0xf]
        %v465 = vld [vmem:[%s398 + $0xc] sm:$0xf]
        %v466 = vld [vmem:[%s398 + $0x10] sm:$0xf]
        %v467 = vld [vmem:[%s398 + $0x14] sm:$0xf]
        %v468 = vld [vmem:[%s398 + $0x18] sm:$0xf]
        %v469 = vld [vmem:[%s398 + $0x1c] sm:$0xf]
        %v478 = vrot.slane %v447, 7
        %vm479 = vcmask 1041409
        %v480 = vsel %vm479, %v478, %v446
        %v481 = vrot.slane %v448, 6
        %vm482 = vcmask 1042434
        %v483 = vsel %vm482, %v481, %v480
        %v484 = vrot.slane %v449, 5
        %vm485 = vcmask 1043459
        %v486 = vsel %vm485, %v484, %v483
        %v487 = vrot.slane %v450, 4
        %vm488 = vcmask 1044484
        %v489 = vsel %vm488, %v487, %v486
        %v490 = vrot.slane %v451, 3
        %vm491 = vcmask 1045509
        %v492 = vsel %vm491, %v490, %v489
        %v493 = vrot.slane %v452, 2
        %vm494 = vcmask 1046534
        %v495 = vsel %vm494, %v493, %v492
        %v496 = vrot.slane %v453, 1
        %vm497 = vcmask 1047559
        %v498 = vsel %vm497, %v496, %v495
        %v507 = vrot.slane %v455, 7
        %v508 = vsel %vm479, %v507, %v454
        %v509 = vrot.slane %v456, 6
        %v510 = vsel %vm482, %v509, %v508
        %v511 = vrot.slane %v457, 5
        %v512 = vsel %vm485, %v511, %v510
        %v513 = vrot.slane %v458, 4
        %v514 = vsel %vm488, %v513, %v512
        %v515 = vrot.slane %v459, 3
        %v516 = vsel %vm491, %v515, %v514
        %v517 = vrot.slane %v460, 2
        %v518 = vsel %vm494, %v517, %v516
        %v519 = vrot.slane %v461, 1
        %v520 = vsel %vm497, %v519, %v518
        %vm521 = vcmask 64512
        %v522 = vsel %vm521, %v498, 0
        %v524 = vsel %vm521, %v520, 0
        %526 = vmatprep.subr.mxu0 0.0
        %527 = vmatpush1.xpose.msra.mxu0 0.0
        %528 = vmatprep.subr.mxu0 0.0
        %529 = vmatpush1.xpose.msra.mxu0 0.0
        %530 = vmatprep.subr.mxu0 0.0
        %531 = vmatpush1.xpose.msra.mxu0 0.0
        %532 = vmatprep.subr.mxu0 0.0
        %533 = vmatpush1.xpose.msra.mxu0 0.0
        %534 = vmatprep.subr.mxu0 0.0
        %535 = vmatpush1.xpose.msra.mxu0 0.0
        %536 = vmatprep.subr.mxu0 0.0
        %537 = vmatpush1.xpose.msra.mxu0 0.0
        %538 = vmatprep.subr.mxu0 0.0
        %539 = vmatpush1.xpose.msra.mxu0 0.0
        %540 = vmatprep.subr.mxu0 0.0
        %541 = vmatpush1.xpose.msra.mxu0 0.0
        %542 = vmatprep.subr.mxu0 0.0
        %543 = vmatpush1.xpose.msra.mxu0 0.0
        %544 = vmatprep.subr.mxu0 0.0
        %545 = vmatpush1.xpose.msra.mxu0 0.0
        %546 = vmatprep.subr.mxu0 0.0
        %547 = vmatpush1.xpose.msra.mxu0 0.0
        %548 = vmatprep.subr.mxu0 0.0
        %549 = vmatpush1.xpose.msra.mxu0 0.0
        %550 = vmatprep.subr.mxu0 0.0
        %551 = vmatpush1.xpose.msra.mxu0 0.0
        %552 = vmatprep.subr.mxu0 0.0
        %553 = vmatpush1.xpose.msra.mxu0 0.0
        %554 = vmatprep.subr.mxu0 0.0
        %555 = vmatpush1.xpose.msra.mxu0 0.0
        %556 = vmatprep.subr.mxu0 0.0
        %557 = vmatpush1.xpose.msra.mxu0 %v524
        %558 = vmatprep.subr.mxu0 0.0
        %559 = vmatpush2.xpose.msra.mxu0 0.0
        %560 = vmatprep.subr.mxu0 0.0
        %561 = vmatpush2.xpose.msra.mxu0 0.0
        %562 = vmatprep.subr.mxu0 0.0
        %563 = vmatpush2.xpose.msra.mxu0 0.0
        %564 = vmatprep.subr.mxu0 0.0
        %565 = vmatpush2.xpose.msra.mxu0 0.0
        %566 = vmatprep.subr.mxu0 0.0
        %567 = vmatpush2.xpose.msra.mxu0 0.0
        %568 = vmatprep.subr.mxu0 0.0
        %569 = vmatpush2.xpose.msra.mxu0 0.0
        %570 = vmatprep.subr.mxu0 0.0
        %571 = vmatpush2.xpose.msra.mxu0 0.0
        %572 = vmatprep.subr.mxu0 0.0
        %573 = vmatpush2.xpose.msra.mxu0 0.0
        %574 = vmatprep.subr.mxu0 0.0
        %575 = vmatpush2.xpose.msra.mxu0 0.0
        %576 = vmatprep.subr.mxu0 0.0
        %577 = vmatpush2.xpose.msra.mxu0 0.0
        %578 = vmatprep.subr.mxu0 0.0
        %579 = vmatpush2.xpose.msra.mxu0 0.0
        %580 = vmatprep.subr.mxu0 0.0
        %581 = vmatpush2.xpose.msra.mxu0 0.0
        %582 = vmatprep.subr.mxu0 0.0
        %583 = vmatpush2.xpose.msra.mxu0 0.0
        %584 = vmatprep.subr.mxu0 0.0
        %585 = vmatpush2.xpose.msra.mxu0 0.0
        %586 = vmatprep.subr.mxu0 0.0
        %587 = vmatpush2.xpose.msra.mxu0 0.0
        %588 = vmatprep.subr.mxu0 0.0
        %589 = vmatpush2.xpose.msra.mxu0 0.0
        %590 = vmatprep.mubr.f32.mxu0 0.0
        %591 = vmatmul.mubr.f32.gmra.mxu0 %v522
        %v592 = vpop.f32.mrf.mxu0
        %v593 = vadd.f32 0.0, %v592
        %v594 = vpop.f32.mrf.mxu0
        %595 = vdwg.mxu0
        %v596 = vsel %vm437, %v593, -1e+30
        %v597 = vsel %vm521, %v596, -inf
        %598 = vmax.xlane.f32.xlu0 %v597
        %v599 = vpop.xlane.xlu0 %598
        %v600 = vsub.f32 %v596, %v599
        %v601 = vmul.f32 %v600, 1.442695
        %v602 = vpow.pop %v601
        %v603 = vsel %vm521, %v602, 0.0
        %604 = vadd.xlane.f32.xlu0 %v603
        %v605 = vpop.xlane.xlu0 %604
        %v614 = vrot.slane %v463, 7
        %v615 = vsel %vm479, %v614, %v462
        %v616 = vrot.slane %v464, 6
        %v617 = vsel %vm482, %v616, %v615
        %v618 = vrot.slane %v465, 5
        %v619 = vsel %vm485, %v618, %v617
        %v620 = vrot.slane %v466, 4
        %v621 = vsel %vm488, %v620, %v619
        %v622 = vrot.slane %v467, 3
        %v623 = vsel %vm491, %v622, %v621
        %v624 = vrot.slane %v468, 2
        %v625 = vsel %vm494, %v624, %v623
        %v626 = vrot.slane %v469, 1
        %v627 = vsel %vm497, %v626, %v625
        %v630 = vsel %vm521, %v602, 0
        %632 = vmatprep.subr.mxu0 0.0
        %633 = vmatpush1.msra.mxu0 0.0
        %634 = vmatprep.subr.mxu0 0.0
        %635 = vmatpush1.msra.mxu0 0.0
        %636 = vmatprep.subr.mxu0 0.0
        %637 = vmatpush1.msra.mxu0 0.0
        %638 = vmatprep.subr.mxu0 0.0
        %639 = vmatpush1.msra.mxu0 0.0
        %640 = vmatprep.subr.mxu0 0.0
        %641 = vmatpush1.msra.mxu0 0.0
        %642 = vmatprep.subr.mxu0 0.0
        %643 = vmatpush1.msra.mxu0 0.0
        %644 = vmatprep.subr.mxu0 0.0
        %645 = vmatpush1.msra.mxu0 0.0
        %646 = vmatprep.subr.mxu0 0.0
        %647 = vmatpush1.msra.mxu0 0.0
        %648 = vmatprep.subr.mxu0 0.0
        %649 = vmatpush1.msra.mxu0 0.0
        %650 = vmatprep.subr.mxu0 0.0
        %651 = vmatpush1.msra.mxu0 0.0
        %652 = vmatprep.subr.mxu0 0.0
        %653 = vmatpush1.msra.mxu0 0.0
        %654 = vmatprep.subr.mxu0 0.0
        %655 = vmatpush1.msra.mxu0 0.0
        %656 = vmatprep.subr.mxu0 0.0
        %657 = vmatpush1.msra.mxu0 0.0
        %658 = vmatprep.subr.mxu0 0.0
        %659 = vmatpush1.msra.mxu0 0.0
        %660 = vmatprep.subr.mxu0 0.0
        %661 = vmatpush1.msra.mxu0 0.0
        %662 = vmatprep.subr.mxu0 0.0
        %663 = vmatpush1.msra.mxu0 %v627
        %664 = vmatprep.subr.mxu0 0.0
        %665 = vmatpush2.msra.mxu0 0.0
        %666 = vmatprep.subr.mxu0 0.0
        %667 = vmatpush2.msra.mxu0 0.0
        %668 = vmatprep.subr.mxu0 0.0
        %669 = vmatpush2.msra.mxu0 0.0
        %670 = vmatprep.subr.mxu0 0.0
        %671 = vmatpush2.msra.mxu0 0.0
        %672 = vmatprep.subr.mxu0 0.0
        %673 = vmatpush2.msra.mxu0 0.0
        %674 = vmatprep.subr.mxu0 0.0
        %675 = vmatpush2.msra.mxu0 0.0
        %676 = vmatprep.subr.mxu0 0.0
        %677 = vmatpush2.msra.mxu0 0.0
        %678 = vmatprep.subr.mxu0 0.0
        %679 = vmatpush2.msra.mxu0 0.0
        %680 = vmatprep.subr.mxu0 0.0
        %681 = vmatpush2.msra.mxu0 0.0
        %682 = vmatprep.subr.mxu0 0.0
        %683 = vmatpush2.msra.mxu0 0.0
        %684 = vmatprep.subr.mxu0 0.0
        %685 = vmatpush2.msra.mxu0 0.0
        %686 = vmatprep.subr.mxu0 0.0
        %687 = vmatpush2.msra.mxu0 0.0
        %688 = vmatprep.subr.mxu0 0.0
        %689 = vmatpush2.msra.mxu0 0.0
        %690 = vmatprep.subr.mxu0 0.0
        %691 = vmatpush2.msra.mxu0 0.0
        %692 = vmatprep.subr.mxu0 0.0
        %693 = vmatpush2.msra.mxu0 0.0
        %694 = vmatprep.subr.mxu0 0.0
        %695 = vmatpush2.msra.mxu0 0.0
        %696 = vmatprep.mubr.f32.mxu0 0.0
        %697 = vmatmul.mubr.f32.gmra.mxu0 %v630
        %v698 = vpop.f32.mrf.mxu0
        %v699 = vadd.f32 0.0, %v698
        %v700 = vpop.f32.mrf.mxu0
        %701 = vdwg.mxu0
        %v702 = vrcp.pop %v605
        %v703 = vmul.f32 %v699, %v702
        %704 = vst.msk [vmem:[%s432] sm:$0xff] %vm521, %v703
        %v705 = vrot.slane %v446, 1
        %v706 = vsel %vm479, %v447, %v705
        %v707 = vrot.slane %v448, 7
        %v708 = vsel %vm482, %v707, %v706
        %v709 = vrot.slane %v449, 6
        %v710 = vsel %vm485, %v709, %v708
        %v711 = vrot.slane %v450, 5
        %v712 = vsel %vm488, %v711, %v710
        %v713 = vrot.slane %v451, 4
        %v714 = vsel %vm491, %v713, %v712
        %v715 = vrot.slane %v452, 3
        %v716 = vsel %vm494, %v715, %v714
        %v717 = vrot.slane %v453, 2
        %v718 = vsel %vm497, %v717, %v716
        %v719 = vrot.slane %v454, 1
        %v720 = vsel %vm479, %v455, %v719
        %v721 = vrot.slane %v456, 7
        %v722 = vsel %vm482, %v721, %v720
        %v723 = vrot.slane %v457, 6
        %v724 = vsel %vm485, %v723, %v722
        %v725 = vrot.slane %v458, 5
        %v726 = vsel %vm488, %v725, %v724
        %v727 = vrot.slane %v459, 4
        %v728 = vsel %vm491, %v727, %v726
        %v729 = vrot.slane %v460, 3
        %v730 = vsel %vm494, %v729, %v728
        %v731 = vrot.slane %v461, 2
        %v732 = vsel %vm497, %v731, %v730
        %v733 = vsel %vm521, %v718, 0
        %v735 = vsel %vm521, %v732, 0
        %737 = vmatprep.subr.mxu0 0.0
        %738 = vmatpush1.xpose.msra.mxu0 0.0
        %739 = vmatprep.subr.mxu0 0.0
        %740 = vmatpush1.xpose.msra.mxu0 0.0
        %741 = vmatprep.subr.mxu0 0.0
        %742 = vmatpush1.xpose.msra.mxu0 0.0
        %743 = vmatprep.subr.mxu0 0.0
        %744 = vmatpush1.xpose.msra.mxu0 0.0
        %745 = vmatprep.subr.mxu0 0.0
        %746 = vmatpush1.xpose.msra.mxu0 0.0
        %747 = vmatprep.subr.mxu0 0.0
        %748 = vmatpush1.xpose.msra.mxu0 0.0
        %749 = vmatprep.subr.mxu0 0.0
        %750 = vmatpush1.xpose.msra.mxu0 0.0
        %751 = vmatprep.subr.mxu0 0.0
        %752 = vmatpush1.xpose.msra.mxu0 0.0
        %753 = vmatprep.subr.mxu0 0.0
        %754 = vmatpush1.xpose.msra.mxu0 0.0
        %755 = vmatprep.subr.mxu0 0.0
        %756 = vmatpush1.xpose.msra.mxu0 0.0
        %757 = vmatprep.subr.mxu0 0.0
        %758 = vmatpush1.xpose.msra.mxu0 0.0
        %759 = vmatprep.subr.mxu0 0.0
        %760 = vmatpush1.xpose.msra.mxu0 0.0
        %761 = vmatprep.subr.mxu0 0.0
        %762 = vmatpush1.xpose.msra.mxu0 0.0
        %763 = vmatprep.subr.mxu0 0.0
        %764 = vmatpush1.xpose.msra.mxu0 0.0
        %765 = vmatprep.subr.mxu0 0.0
        %766 = vmatpush1.xpose.msra.mxu0 0.0
        %767 = vmatprep.subr.mxu0 0.0
        %768 = vmatpush1.xpose.msra.mxu0 %v735
        %769 = vmatprep.subr.mxu0 0.0
        %770 = vmatpush2.xpose.msra.mxu0 0.0
        %771 = vmatprep.subr.mxu0 0.0
        %772 = vmatpush2.xpose.msra.mxu0 0.0
        %773 = vmatprep.subr.mxu0 0.0
        %774 = vmatpush2.xpose.msra.mxu0 0.0
        %775 = vmatprep.subr.mxu0 0.0
        %776 = vmatpush2.xpose.msra.mxu0 0.0
        %777 = vmatprep.subr.mxu0 0.0
        %778 = vmatpush2.xpose.msra.mxu0 0.0
        %779 = vmatprep.subr.mxu0 0.0
        %780 = vmatpush2.xpose.msra.mxu0 0.0
        %781 = vmatprep.subr.mxu0 0.0
        %782 = vmatpush2.xpose.msra.mxu0 0.0
        %783 = vmatprep.subr.mxu0 0.0
        %784 = vmatpush2.xpose.msra.mxu0 0.0
        %785 = vmatprep.subr.mxu0 0.0
        %786 = vmatpush2.xpose.msra.mxu0 0.0
        %787 = vmatprep.subr.mxu0 0.0
        %788 = vmatpush2.xpose.msra.mxu0 0.0
        %789 = vmatprep.subr.mxu0 0.0
        %790 = vmatpush2.xpose.msra.mxu0 0.0
        %791 = vmatprep.subr.mxu0 0.0
        %792 = vmatpush2.xpose.msra.mxu0 0.0
        %793 = vmatprep.subr.mxu0 0.0
        %794 = vmatpush2.xpose.msra.mxu0 0.0
        %795 = vmatprep.subr.mxu0 0.0
        %796 = vmatpush2.xpose.msra.mxu0 0.0
        %797 = vmatprep.subr.mxu0 0.0
        %798 = vmatpush2.xpose.msra.mxu0 0.0
        %799 = vmatprep.subr.mxu0 0.0
        %800 = vmatpush2.xpose.msra.mxu0 0.0
        %801 = vmatprep.mubr.f32.mxu0 0.0
        %802 = vmatmul.mubr.f32.gmra.mxu0 %v733
        %v803 = vpop.f32.mrf.mxu0
        %v804 = vadd.f32 0.0, %v803
        %v805 = vpop.f32.mrf.mxu0
        %806 = vdwg.mxu0
        %v807 = vsel %vm437, %v804, -1e+30
        %v808 = vsel %vm521, %v807, -inf
        %809 = vmax.xlane.f32.xlu0 %v808
        %v810 = vpop.xlane.xlu0 %809
        %v811 = vsub.f32 %v807, %v810
        %v812 = vmul.f32 %v811, 1.442695
        %v813 = vpow.pop %v812
        %v814 = vsel %vm521, %v813, 0.0
        %815 = vadd.xlane.f32.xlu0 %v814
        %v816 = vpop.xlane.xlu0 %815
        %v817 = vrot.slane %v462, 1
        %v818 = vsel %vm479, %v463, %v817
        %v819 = vrot.slane %v464, 7
        %v820 = vsel %vm482, %v819, %v818
        %v821 = vrot.slane %v465, 6
        %v822 = vsel %vm485, %v821, %v820
        %v823 = vrot.slane %v466, 5
        %v824 = vsel %vm488, %v823, %v822
        %v825 = vrot.slane %v467, 4
        %v826 = vsel %vm491, %v825, %v824
        %v827 = vrot.slane %v468, 3
        %v828 = vsel %vm494, %v827, %v826
        %v829 = vrot.slane %v469, 2
        %v830 = vsel %vm497, %v829, %v828
        %v833 = vsel %vm521, %v813, 0
        %835 = vmatprep.subr.mxu0 0.0
        %836 = vmatpush1.msra.mxu0 0.0
        %837 = vmatprep.subr.mxu0 0.0
        %838 = vmatpush1.msra.mxu0 0.0
        %839 = vmatprep.subr.mxu0 0.0
        %840 = vmatpush1.msra.mxu0 0.0
        %841 = vmatprep.subr.mxu0 0.0
        %842 = vmatpush1.msra.mxu0 0.0
        %843 = vmatprep.subr.mxu0 0.0
        %844 = vmatpush1.msra.mxu0 0.0
        %845 = vmatprep.subr.mxu0 0.0
        %846 = vmatpush1.msra.mxu0 0.0
        %847 = vmatprep.subr.mxu0 0.0
        %848 = vmatpush1.msra.mxu0 0.0
        %849 = vmatprep.subr.mxu0 0.0
        %850 = vmatpush1.msra.mxu0 0.0
        %851 = vmatprep.subr.mxu0 0.0
        %852 = vmatpush1.msra.mxu0 0.0
        %853 = vmatprep.subr.mxu0 0.0
        %854 = vmatpush1.msra.mxu0 0.0
        %855 = vmatprep.subr.mxu0 0.0
        %856 = vmatpush1.msra.mxu0 0.0
        %857 = vmatprep.subr.mxu0 0.0
        %858 = vmatpush1.msra.mxu0 0.0
        %859 = vmatprep.subr.mxu0 0.0
        %860 = vmatpush1.msra.mxu0 0.0
        %861 = vmatprep.subr.mxu0 0.0
        %862 = vmatpush1.msra.mxu0 0.0
        %863 = vmatprep.subr.mxu0 0.0
        %864 = vmatpush1.msra.mxu0 0.0
        %865 = vmatprep.subr.mxu0 0.0
        %866 = vmatpush1.msra.mxu0 %v830
        %867 = vmatprep.subr.mxu0 0.0
        %868 = vmatpush2.msra.mxu0 0.0
        %869 = vmatprep.subr.mxu0 0.0
        %870 = vmatpush2.msra.mxu0 0.0
        %871 = vmatprep.subr.mxu0 0.0
        %872 = vmatpush2.msra.mxu0 0.0
        %873 = vmatprep.subr.mxu0 0.0
        %874 = vmatpush2.msra.mxu0 0.0
        %875 = vmatprep.subr.mxu0 0.0
        %876 = vmatpush2.msra.mxu0 0.0
        %877 = vmatprep.subr.mxu0 0.0
        %878 = vmatpush2.msra.mxu0 0.0
        %879 = vmatprep.subr.mxu0 0.0
        %880 = vmatpush2.msra.mxu0 0.0
        %881 = vmatprep.subr.mxu0 0.0
        %882 = vmatpush2.msra.mxu0 0.0
        %883 = vmatprep.subr.mxu0 0.0
        %884 = vmatpush2.msra.mxu0 0.0
        %885 = vmatprep.subr.mxu0 0.0
        %886 = vmatpush2.msra.mxu0 0.0
        %887 = vmatprep.subr.mxu0 0.0
        %888 = vmatpush2.msra.mxu0 0.0
        %889 = vmatprep.subr.mxu0 0.0
        %890 = vmatpush2.msra.mxu0 0.0
        %891 = vmatprep.subr.mxu0 0.0
        %892 = vmatpush2.msra.mxu0 0.0
        %893 = vmatprep.subr.mxu0 0.0
        %894 = vmatpush2.msra.mxu0 0.0
        %895 = vmatprep.subr.mxu0 0.0
        %896 = vmatpush2.msra.mxu0 0.0
        %897 = vmatprep.subr.mxu0 0.0
        %898 = vmatpush2.msra.mxu0 0.0
        %899 = vmatprep.mubr.f32.mxu0 0.0
        %900 = vmatmul.mubr.f32.gmra.mxu0 %v833
        %v901 = vpop.f32.mrf.mxu0
        %v902 = vadd.f32 0.0, %v901
        %v903 = vpop.f32.mrf.mxu0
        %904 = vdwg.mxu0
        %v905 = vrcp.pop %v816
        %v906 = vmul.f32 %v902, %v905
        %908 = vrot.lane.b32.xlu0 %v906, 8
        %v909 = vpop.permute.xlu0 %908
        %vm911 = vcmask 130112
        %912 = vst.msk [vmem:[%s432] sm:$0xff] %vm911, %v909
        %v913 = vrot.slane %v446, 2
        %v914 = vrot.slane %v447, 1
        %v915 = vsel %vm479, %v914, %v913
        %v916 = vsel %vm482, %v448, %v915
        %v917 = vrot.slane %v449, 7
        %v918 = vsel %vm485, %v917, %v916
        %v919 = vrot.slane %v450, 6
        %v920 = vsel %vm488, %v919, %v918
        %v921 = vrot.slane %v451, 5
        %v922 = vsel %vm491, %v921, %v920
        %v923 = vrot.slane %v452, 4
        %v924 = vsel %vm494, %v923, %v922
        %v925 = vrot.slane %v453, 3
        %v926 = vsel %vm497, %v925, %v924
        %v927 = vrot.slane %v454, 2
        %v928 = vrot.slane %v455, 1
        %v929 = vsel %vm479, %v928, %v927
        %v930 = vsel %vm482, %v456, %v929
        %v931 = vrot.slane %v457, 7
        %v932 = vsel %vm485, %v931, %v930
        %v933 = vrot.slane %v458, 6
        %v934 = vsel %vm488, %v933, %v932
        %v935 = vrot.slane %v459, 5
        %v936 = vsel %vm491, %v935, %v934
        %v937 = vrot.slane %v460, 4
        %v938 = vsel %vm494, %v937, %v936
        %v939 = vrot.slane %v461, 3
        %v940 = vsel %vm497, %v939, %v938
        %v941 = vsel %vm521, %v926, 0
        %v943 = vsel %vm521, %v940, 0
        %945 = vmatprep.subr.mxu0 0.0
        %946 = vmatpush1.xpose.msra.mxu0 0.0
        %947 = vmatprep.subr.mxu0 0.0
        %948 = vmatpush1.xpose.msra.mxu0 0.0
        %949 = vmatprep.subr.mxu0 0.0
        %950 = vmatpush1.xpose.msra.mxu0 0.0
        %951 = vmatprep.subr.mxu0 0.0
        %952 = vmatpush1.xpose.msra.mxu0 0.0
        %953 = vmatprep.subr.mxu0 0.0
        %954 = vmatpush1.xpose.msra.mxu0 0.0
        %955 = vmatprep.subr.mxu0 0.0
        %956 = vmatpush1.xpose.msra.mxu0 0.0
        %957 = vmatprep.subr.mxu0 0.0
        %958 = vmatpush1.xpose.msra.mxu0 0.0
        %959 = vmatprep.subr.mxu0 0.0
        %960 = vmatpush1.xpose.msra.mxu0 0.0
        %961 = vmatprep.subr.mxu0 0.0
        %962 = vmatpush1.xpose.msra.mxu0 0.0
        %963 = vmatprep.subr.mxu0 0.0
        %964 = vmatpush1.xpose.msra.mxu0 0.0
        %965 = vmatprep.subr.mxu0 0.0
        %966 = vmatpush1.xpose.msra.mxu0 0.0
        %967 = vmatprep.subr.mxu0 0.0
        %968 = vmatpush1.xpose.msra.mxu0 0.0
        %969 = vmatprep.subr.mxu0 0.0
        %970 = vmatpush1.xpose.msra.mxu0 0.0
        %971 = vmatprep.subr.mxu0 0.0
        %972 = vmatpush1.xpose.msra.mxu0 0.0
        %973 = vmatprep.subr.mxu0 0.0
        %974 = vmatpush1.xpose.msra.mxu0 0.0
        %975 = vmatprep.subr.mxu0 0.0
        %976 = vmatpush1.xpose.msra.mxu0 %v943
        %977 = vmatprep.subr.mxu0 0.0
        %978 = vmatpush2.xpose.msra.mxu0 0.0
        %979 = vmatprep.subr.mxu0 0.0
        %980 = vmatpush2.xpose.msra.mxu0 0.0
        %981 = vmatprep.subr.mxu0 0.0
        %982 = vmatpush2.xpose.msra.mxu0 0.0
        %983 = vmatprep.subr.mxu0 0.0
        %984 = vmatpush2.xpose.msra.mxu0 0.0
        %985 = vmatprep.subr.mxu0 0.0
        %986 = vmatpush2.xpose.msra.mxu0 0.0
        %987 = vmatprep.subr.mxu0 0.0
        %988 = vmatpush2.xpose.msra.mxu0 0.0
        %989 = vmatprep.subr.mxu0 0.0
        %990 = vmatpush2.xpose.msra.mxu0 0.0
        %991 = vmatprep.subr.mxu0 0.0
        %992 = vmatpush2.xpose.msra.mxu0 0.0
        %993 = vmatprep.subr.mxu0 0.0
        %994 = vmatpush2.xpose.msra.mxu0 0.0
        %995 = vmatprep.subr.mxu0 0.0
        %996 = vmatpush2.xpose.msra.mxu0 0.0
        %997 = vmatprep.subr.mxu0 0.0
        %998 = vmatpush2.xpose.msra.mxu0 0.0
        %999 = vmatprep.subr.mxu0 0.0
        %1000 = vmatpush2.xpose.msra.mxu0 0.0
        %1001 = vmatprep.subr.mxu0 0.0
        %1002 = vmatpush2.xpose.msra.mxu0 0.0
        %1003 = vmatprep.subr.mxu0 0.0
        %1004 = vmatpush2.xpose.msra.mxu0 0.0
        %1005 = vmatprep.subr.mxu0 0.0
        %1006 = vmatpush2.xpose.msra.mxu0 0.0
        %1007 = vmatprep.subr.mxu0 0.0
        %1008 = vmatpush2.xpose.msra.mxu0 0.0
        %1009 = vmatprep.mubr.f32.mxu0 0.0
        %1010 = vmatmul.mubr.f32.gmra.mxu0 %v941
        %v1011 = vpop.f32.mrf.mxu0
        %v1012 = vadd.f32 0.0, %v1011
        %v1013 = vpop.f32.mrf.mxu0
        %1014 = vdwg.mxu0
        %v1015 = vsel %vm437, %v1012, -1e+30
        %v1016 = vsel %vm521, %v1015, -inf
        %1017 = vmax.xlane.f32.xlu0 %v1016
        %v1018 = vpop.xlane.xlu0 %1017
        %v1019 = vsub.f32 %v1015, %v1018
        %v1020 = vmul.f32 %v1019, 1.442695
        %v1021 = vpow.pop %v1020
        %v1022 = vsel %vm521, %v1021, 0.0
        %1023 = vadd.xlane.f32.xlu0 %v1022
        %v1024 = vpop.xlane.xlu0 %1023
        %v1025 = vrot.slane %v462, 2
        %v1026 = vrot.slane %v463, 1
        %v1027 = vsel %vm479, %v1026, %v1025
        %v1028 = vsel %vm482, %v464, %v1027
        %v1029 = vrot.slane %v465, 7
        %v1030 = vsel %vm485, %v1029, %v1028
        %v1031 = vrot.slane %v466, 6
        %v1032 = vsel %vm488, %v1031, %v1030
        %v1033 = vrot.slane %v467, 5
        %v1034 = vsel %vm491, %v1033, %v1032
        %v1035 = vrot.slane %v468, 4
        %v1036 = vsel %vm494, %v1035, %v1034
        %v1037 = vrot.slane %v469, 3
        %v1038 = vsel %vm497, %v1037, %v1036
        %v1041 = vsel %vm521, %v1021, 0
        %1043 = vmatprep.subr.mxu0 0.0
        %1044 = vmatpush1.msra.mxu0 0.0
        %1045 = vmatprep.subr.mxu0 0.0
        %1046 = vmatpush1.msra.mxu0 0.0
        %1047 = vmatprep.subr.mxu0 0.0
        %1048 = vmatpush1.msra.mxu0 0.0
        %1049 = vmatprep.subr.mxu0 0.0
        %1050 = vmatpush1.msra.mxu0 0.0
        %1051 = vmatprep.subr.mxu0 0.0
        %1052 = vmatpush1.msra.mxu0 0.0
        %1053 = vmatprep.subr.mxu0 0.0
        %1054 = vmatpush1.msra.mxu0 0.0
        %1055 = vmatprep.subr.mxu0 0.0
        %1056 = vmatpush1.msra.mxu0 0.0
        %1057 = vmatprep.subr.mxu0 0.0
        %1058 = vmatpush1.msra.mxu0 0.0
        %1059 = vmatprep.subr.mxu0 0.0
        %1060 = vmatpush1.msra.mxu0 0.0
        %1061 = vmatprep.subr.mxu0 0.0
        %1062 = vmatpush1.msra.mxu0 0.0
        %1063 = vmatprep.subr.mxu0 0.0
        %1064 = vmatpush1.msra.mxu0 0.0
        %1065 = vmatprep.subr.mxu0 0.0
        %1066 = vmatpush1.msra.mxu0 0.0
        %1067 = vmatprep.subr.mxu0 0.0
        %1068 = vmatpush1.msra.mxu0 0.0
        %1069 = vmatprep.subr.mxu0 0.0
        %1070 = vmatpush1.msra.mxu0 0.0
        %1071 = vmatprep.subr.mxu0 0.0
        %1072 = vmatpush1.msra.mxu0 0.0
        %1073 = vmatprep.subr.mxu0 0.0
        %1074 = vmatpush1.msra.mxu0 %v1038
        %1075 = vmatprep.subr.mxu0 0.0
        %1076 = vmatpush2.msra.mxu0 0.0
        %1077 = vmatprep.subr.mxu0 0.0
        %1078 = vmatpush2.msra.mxu0 0.0
        %1079 = vmatprep.subr.mxu0 0.0
        %1080 = vmatpush2.msra.mxu0 0.0
        %1081 = vmatprep.subr.mxu0 0.0
        %1082 = vmatpush2.msra.mxu0 0.0
        %1083 = vmatprep.subr.mxu0 0.0
        %1084 = vmatpush2.msra.mxu0 0.0
        %1085 = vmatprep.subr.mxu0 0.0
        %1086 = vmatpush2.msra.mxu0 0.0
        %1087 = vmatprep.subr.mxu0 0.0
        %1088 = vmatpush2.msra.mxu0 0.0
        %1089 = vmatprep.subr.mxu0 0.0
        %1090 = vmatpush2.msra.mxu0 0.0
        %1091 = vmatprep.subr.mxu0 0.0
        %1092 = vmatpush2.msra.mxu0 0.0
        %1093 = vmatprep.subr.mxu0 0.0
        %1094 = vmatpush2.msra.mxu0 0.0
        %1095 = vmatprep.subr.mxu0 0.0
        %1096 = vmatpush2.msra.mxu0 0.0
        %1097 = vmatprep.subr.mxu0 0.0
        %1098 = vmatpush2.msra.mxu0 0.0
        %1099 = vmatprep.subr.mxu0 0.0
        %1100 = vmatpush2.msra.mxu0 0.0
        %1101 = vmatprep.subr.mxu0 0.0
        %1102 = vmatpush2.msra.mxu0 0.0
        %1103 = vmatprep.subr.mxu0 0.0
        %1104 = vmatpush2.msra.mxu0 0.0
        %1105 = vmatprep.subr.mxu0 0.0
        %1106 = vmatpush2.msra.mxu0 0.0
        %1107 = vmatprep.mubr.f32.mxu0 0.0
        %1108 = vmatmul.mubr.f32.gmra.mxu0 %v1041
        %v1109 = vpop.f32.mrf.mxu0
        %v1110 = vadd.f32 0.0, %v1109
        %v1111 = vpop.f32.mrf.mxu0
        %1112 = vdwg.mxu0
        %v1113 = vrcp.pop %v1024
        %v1114 = vmul.f32 %v1110, %v1113
        %1116 = vrot.lane.b32.xlu0 %v1114, 16
        %v1117 = vpop.permute.xlu0 %1116
        %vm1119 = vcmask 195712
        %1120 = vst.msk [vmem:[%s432] sm:$0xff] %vm1119, %v1117
        %v1121 = vrot.slane %v446, 3
        %v1122 = vrot.slane %v447, 2
        %v1123 = vsel %vm479, %v1122, %v1121
        %v1124 = vrot.slane %v448, 1
        %v1125 = vsel %vm482, %v1124, %v1123
        %v1126 = vsel %vm485, %v449, %v1125
        %v1127 = vrot.slane %v450, 7
        %v1128 = vsel %vm488, %v1127, %v1126
        %v1129 = vrot.slane %v451, 6
        %v1130 = vsel %vm491, %v1129, %v1128
        %v1131 = vrot.slane %v452, 5
        %v1132 = vsel %vm494, %v1131, %v1130
        %v1133 = vrot.slane %v453, 4
        %v1134 = vsel %vm497, %v1133, %v1132
        %v1135 = vrot.slane %v454, 3
        %v1136 = vrot.slane %v455, 2
        %v1137 = vsel %vm479, %v1136, %v1135
        %v1138 = vrot.slane %v456, 1
        %v1139 = vsel %vm482, %v1138, %v1137
        %v1140 = vsel %vm485, %v457, %v1139
        %v1141 = vrot.slane %v458, 7
        %v1142 = vsel %vm488, %v1141, %v1140
        %v1143 = vrot.slane %v459, 6
        %v1144 = vsel %vm491, %v1143, %v1142
        %v1145 = vrot.slane %v460, 5
        %v1146 = vsel %vm494, %v1145, %v1144
        %v1147 = vrot.slane %v461, 4
        %v1148 = vsel %vm497, %v1147, %v1146
        %v1149 = vsel %vm521, %v1134, 0
        %v1151 = vsel %vm521, %v1148, 0
        %1153 = vmatprep.subr.mxu0 0.0
        %1154 = vmatpush1.xpose.msra.mxu0 0.0
        %1155 = vmatprep.subr.mxu0 0.0
        %1156 = vmatpush1.xpose.msra.mxu0 0.0
        %1157 = vmatprep.subr.mxu0 0.0
        %1158 = vmatpush1.xpose.msra.mxu0 0.0
        %1159 = vmatprep.subr.mxu0 0.0
        %1160 = vmatpush1.xpose.msra.mxu0 0.0
        %1161 = vmatprep.subr.mxu0 0.0
        %1162 = vmatpush1.xpose.msra.mxu0 0.0
        %1163 = vmatprep.subr.mxu0 0.0
        %1164 = vmatpush1.xpose.msra.mxu0 0.0
        %1165 = vmatprep.subr.mxu0 0.0
        %1166 = vmatpush1.xpose.msra.mxu0 0.0
        %1167 = vmatprep.subr.mxu0 0.0
        %1168 = vmatpush1.xpose.msra.mxu0 0.0
        %1169 = vmatprep.subr.mxu0 0.0
        %1170 = vmatpush1.xpose.msra.mxu0 0.0
        %1171 = vmatprep.subr.mxu0 0.0
        %1172 = vmatpush1.xpose.msra.mxu0 0.0
        %1173 = vmatprep.subr.mxu0 0.0
        %1174 = vmatpush1.xpose.msra.mxu0 0.0
        %1175 = vmatprep.subr.mxu0 0.0
        %1176 = vmatpush1.xpose.msra.mxu0 0.0
        %1177 = vmatprep.subr.mxu0 0.0
        %1178 = vmatpush1.xpose.msra.mxu0 0.0
        %1179 = vmatprep.subr.mxu0 0.0
        %1180 = vmatpush1.xpose.msra.mxu0 0.0
        %1181 = vmatprep.subr.mxu0 0.0
        %1182 = vmatpush1.xpose.msra.mxu0 0.0
        %1183 = vmatprep.subr.mxu0 0.0
        %1184 = vmatpush1.xpose.msra.mxu0 %v1151
        %1185 = vmatprep.subr.mxu0 0.0
        %1186 = vmatpush2.xpose.msra.mxu0 0.0
        %1187 = vmatprep.subr.mxu0 0.0
        %1188 = vmatpush2.xpose.msra.mxu0 0.0
        %1189 = vmatprep.subr.mxu0 0.0
        %1190 = vmatpush2.xpose.msra.mxu0 0.0
        %1191 = vmatprep.subr.mxu0 0.0
        %1192 = vmatpush2.xpose.msra.mxu0 0.0
        %1193 = vmatprep.subr.mxu0 0.0
        %1194 = vmatpush2.xpose.msra.mxu0 0.0
        %1195 = vmatprep.subr.mxu0 0.0
        %1196 = vmatpush2.xpose.msra.mxu0 0.0
        %1197 = vmatprep.subr.mxu0 0.0
        %1198 = vmatpush2.xpose.msra.mxu0 0.0
        %1199 = vmatprep.subr.mxu0 0.0
        %1200 = vmatpush2.xpose.msra.mxu0 0.0
        %1201 = vmatprep.subr.mxu0 0.0
        %1202 = vmatpush2.xpose.msra.mxu0 0.0
        %1203 = vmatprep.subr.mxu0 0.0
        %1204 = vmatpush2.xpose.msra.mxu0 0.0
        %1205 = vmatprep.subr.mxu0 0.0
        %1206 = vmatpush2.xpose.msra.mxu0 0.0
        %1207 = vmatprep.subr.mxu0 0.0
        %1208 = vmatpush2.xpose.msra.mxu0 0.0
        %1209 = vmatprep.subr.mxu0 0.0
        %1210 = vmatpush2.xpose.msra.mxu0 0.0
        %1211 = vmatprep.subr.mxu0 0.0
        %1212 = vmatpush2.xpose.msra.mxu0 0.0
        %1213 = vmatprep.subr.mxu0 0.0
        %1214 = vmatpush2.xpose.msra.mxu0 0.0
        %1215 = vmatprep.subr.mxu0 0.0
        %1216 = vmatpush2.xpose.msra.mxu0 0.0
        %1217 = vmatprep.mubr.f32.mxu0 0.0
        %1218 = vmatmul.mubr.f32.gmra.mxu0 %v1149
        %v1219 = vpop.f32.mrf.mxu0
        %v1220 = vadd.f32 0.0, %v1219
        %v1221 = vpop.f32.mrf.mxu0
        %1222 = vdwg.mxu0
        %v1223 = vsel %vm437, %v1220, -1e+30
        %v1224 = vsel %vm521, %v1223, -inf
        %1225 = vmax.xlane.f32.xlu0 %v1224
        %v1226 = vpop.xlane.xlu0 %1225
        %v1227 = vsub.f32 %v1223, %v1226
        %v1228 = vmul.f32 %v1227, 1.442695
        %v1229 = vpow.pop %v1228
        %v1230 = vsel %vm521, %v1229, 0.0
        %1231 = vadd.xlane.f32.xlu0 %v1230
        %v1232 = vpop.xlane.xlu0 %1231
        %v1233 = vrot.slane %v462, 3
        %v1234 = vrot.slane %v463, 2
        %v1235 = vsel %vm479, %v1234, %v1233
        %v1236 = vrot.slane %v464, 1
        %v1237 = vsel %vm482, %v1236, %v1235
        %v1238 = vsel %vm485, %v465, %v1237
        %v1239 = vrot.slane %v466, 7
        %v1240 = vsel %vm488, %v1239, %v1238
        %v1241 = vrot.slane %v467, 6
        %v1242 = vsel %vm491, %v1241, %v1240
        %v1243 = vrot.slane %v468, 5
        %v1244 = vsel %vm494, %v1243, %v1242
        %v1245 = vrot.slane %v469, 4
        %v1246 = vsel %vm497, %v1245, %v1244
        %v1249 = vsel %vm521, %v1229, 0
        %1251 = vmatprep.subr.mxu0 0.0
        %1252 = vmatpush1.msra.mxu0 0.0
        %1253 = vmatprep.subr.mxu0 0.0
        %1254 = vmatpush1.msra.mxu0 0.0
        %1255 = vmatprep.subr.mxu0 0.0
        %1256 = vmatpush1.msra.mxu0 0.0
        %1257 = vmatprep.subr.mxu0 0.0
        %1258 = vmatpush1.msra.mxu0 0.0
        %1259 = vmatprep.subr.mxu0 0.0
        %1260 = vmatpush1.msra.mxu0 0.0
        %1261 = vmatprep.subr.mxu0 0.0
        %1262 = vmatpush1.msra.mxu0 0.0
        %1263 = vmatprep.subr.mxu0 0.0
        %1264 = vmatpush1.msra.mxu0 0.0
        %1265 = vmatprep.subr.mxu0 0.0
        %1266 = vmatpush1.msra.mxu0 0.0
        %1267 = vmatprep.subr.mxu0 0.0
        %1268 = vmatpush1.msra.mxu0 0.0
        %1269 = vmatprep.subr.mxu0 0.0
        %1270 = vmatpush1.msra.mxu0 0.0
        %1271 = vmatprep.subr.mxu0 0.0
        %1272 = vmatpush1.msra.mxu0 0.0
        %1273 = vmatprep.subr.mxu0 0.0
        %1274 = vmatpush1.msra.mxu0 0.0
        %1275 = vmatprep.subr.mxu0 0.0
        %1276 = vmatpush1.msra.mxu0 0.0
        %1277 = vmatprep.subr.mxu0 0.0
        %1278 = vmatpush1.msra.mxu0 0.0
        %1279 = vmatprep.subr.mxu0 0.0
        %1280 = vmatpush1.msra.mxu0 0.0
        %1281 = vmatprep.subr.mxu0 0.0
        %1282 = vmatpush1.msra.mxu0 %v1246
        %1283 = vmatprep.subr.mxu0 0.0
        %1284 = vmatpush2.msra.mxu0 0.0
        %1285 = vmatprep.subr.mxu0 0.0
        %1286 = vmatpush2.msra.mxu0 0.0
        %1287 = vmatprep.subr.mxu0 0.0
        %1288 = vmatpush2.msra.mxu0 0.0
        %1289 = vmatprep.subr.mxu0 0.0
        %1290 = vmatpush2.msra.mxu0 0.0
        %1291 = vmatprep.subr.mxu0 0.0
        %1292 = vmatpush2.msra.mxu0 0.0
        %1293 = vmatprep.subr.mxu0 0.0
        %1294 = vmatpush2.msra.mxu0 0.0
        %1295 = vmatprep.subr.mxu0 0.0
        %1296 = vmatpush2.msra.mxu0 0.0
        %1297 = vmatprep.subr.mxu0 0.0
        %1298 = vmatpush2.msra.mxu0 0.0
        %1299 = vmatprep.subr.mxu0 0.0
        %1300 = vmatpush2.msra.mxu0 0.0
        %1301 = vmatprep.subr.mxu0 0.0
        %1302 = vmatpush2.msra.mxu0 0.0
        %1303 = vmatprep.subr.mxu0 0.0
        %1304 = vmatpush2.msra.mxu0 0.0
        %1305 = vmatprep.subr.mxu0 0.0
        %1306 = vmatpush2.msra.mxu0 0.0
        %1307 = vmatprep.subr.mxu0 0.0
        %1308 = vmatpush2.msra.mxu0 0.0
        %1309 = vmatprep.subr.mxu0 0.0
        %1310 = vmatpush2.msra.mxu0 0.0
        %1311 = vmatprep.subr.mxu0 0.0
        %1312 = vmatpush2.msra.mxu0 0.0
        %1313 = vmatprep.subr.mxu0 0.0
        %1314 = vmatpush2.msra.mxu0 0.0
        %1315 = vmatprep.mubr.f32.mxu0 0.0
        %1316 = vmatmul.mubr.f32.gmra.mxu0 %v1249
        %v1317 = vpop.f32.mrf.mxu0
        %v1318 = vadd.f32 0.0, %v1317
        %v1319 = vpop.f32.mrf.mxu0
        %1320 = vdwg.mxu0
        %v1321 = vrcp.pop %v1232
        %v1322 = vmul.f32 %v1318, %v1321
        %1324 = vrot.lane.b32.xlu0 %v1322, 24
        %v1325 = vpop.permute.xlu0 %1324
        %vm1327 = vcmask 261312
        %1328 = vst.msk [vmem:[%s432] sm:$0xff] %vm1327, %v1325
        %p1329 = scmp.lt.s32.totalorder %s14, 1
        %s1330 = scalar_select %p1329, %s14, 1
        %s1331 = smul.addr %s1330, 8
        %s1332 = scalar_lea.vmem %s3, %s1331
        // Predicated region
        $region156: #{transformer_block.5} parent=142 // pred_check
          %p1333 = pneg %p110
        $region157: #{transformer_block.5} parent=142 // pred_check_branch
          %1335 = sbr.rel (%p1333) target = $region159
        $region158: #{transformer_block.5} parent=142 // pred_region
          _
        $region159: #{transformer_block.5} parent=142 // pred_fallthru
          _
      $region143: #{transformer_block.5} parent=5 // pred_fallthru
        _
      %p1336 = scmp.le.s32.totalorder 2, %s9
      // Predicated region
      $region160: #{transformer_block.5} parent=5 // pred_check
        %p1337 = pneg %p1336
      $region161: #{transformer_block.5} parent=5 // pred_check_branch
        %1339 = sbr.rel (%p1337) target = $region163
      $region162: #{transformer_block.5} parent=5 // pred_region
        %s1340 = ssub.s32 %s9, 2
        // Predicated region
        $region164: #{transformer_block.5} parent=162 // pred_check
          %p1341 = pneg %p116
        $region165: #{transformer_block.5} parent=162 // pred_check_branch
          %1343 = sbr.rel (%p1341) target = $region167
        $region166: #{transformer_block.5} parent=162 // pred_region
          %p1344 = scmp.lt.s32.totalorder %s15, 1
          %s1345 = scalar_select %p1344, %s15, 1
          %s1346 = smul.addr %s1345, 8
          %s1347 = scalar_lea.vmem %s3, %s1346
        $region167: #{transformer_block.5} parent=162 // pred_fallthru
          _
      $region163: #{transformer_block.5} parent=5 // pred_fallthru
        _
    $region6: #{transformer_block.5} parent=1 // loop_footer
      %s13 = sadd.s32 1, %s9
    $region7: #{transformer_block.5} parent=1 // loop_footer_branch
      %8 = sbr.rel target = $region3
    $region8: #{transformer_block.5} parent=1 // loop_exit
      _

</llo_original>
